<compile_context>
chip_gen: v5e
topology: v5e:2x2
jax: 0.10.0
libtpu: 0.0.40
codegen_flags: <defaults>
</compile_context>

<pallas_src>
import math

import numpy as np
import jax
import jax.numpy as jnp
from jax.experimental import pallas as pl
from jax.experimental.pallas import tpu as pltpu

# Small, self-consistent hyper-parameters (args.*)
HIDDEN = 32          # args.hidden_units
HEADS = 2            # args.num_heads
HEAD_DIM = HIDDEN // HEADS
MAXLEN = 8           # args.maxlen
NUM_BLOCKS = 2       # args.num_blocks
BATCH = 2
USER_NUM = 10
ITEM_NUM = 20
EPS = 1e-8           # LayerNorm eps in the reference
BT = BATCH * MAXLEN  # collapsed batch*time rows

# Combined gather-table layout (rows):
#   [0 .. ITEM_NUM]            item_emb       (padding_idx=0 row is zero)
#   [POS_OFF .. POS_OFF+T-1]   pos_emb
#   [USER_OFF .. USER_OFF+U]   user_emb @ wc2 (inference-time fold)
POS_OFF = 32
USER_OFF = POS_OFF + MAXLEN          # 40
TBL_ROWS = 64                        # zero-padded
GROWS = 5 * BT                       # 80 gather rows: log|pos-pos|pos|neg|user

# Packed-parameter layout
#   tbl : (TBL_ROWS, D)         bf16  combined embedding table (see above)
#   wsq : (6*NUM_BLOCKS+1, D, D) bf16 per block [wq, wk, wv, wo, w1, w2] + [wc1]
#   vec : (10*NUM_BLOCKS+3+HEADS, D) f32
#         per block [ln1_g, ln1_b, bq, bk, bv, bo, ln2_g, ln2_b, b1, b2]
#         + [last_g, last_b, bc] + per-head 0/1 lane masks
_WQ, _WK, _WV, _WO, _W1, _W2 = range(6)
_WC1 = 6 * NUM_BLOCKS
_LN1G, _LN1B, _BQ, _BK, _BV, _BO, _LN2G, _LN2B, _B1, _B2 = range(10)
_LASTG = 10 * NUM_BLOCKS
_LASTB = _LASTG + 1
_BC = _LASTG + 2
_HM0 = _LASTG + 3                    # first head-mask row

# Trace-time constants (numpy -> baked as jit constants; never recomputed).
_r = np.arange(BT)[:, None]
_c = np.arange(BT)[None, :]
_ALLOWED = np.logical_and(_r // MAXLEN == _c // MAXLEN, _r >= _c)
NEG_MASK = jnp.asarray(np.where(_ALLOWED, 0.0, -1e30), jnp.float32)   # (BT,BT)
POS_IDS = jnp.asarray(np.tile(np.arange(MAXLEN), BATCH) + POS_OFF, jnp.int32)


def _layernorm(x, g, b):
    """LN with independent lane reductions (mean(x*x) - mu^2), f32, EUP rsqrt."""
    mu = jnp.mean(x, axis=-1, keepdims=True)
    var = jnp.maximum(jnp.mean(x * x, axis=-1, keepdims=True) - mu * mu, 0.0)
    return (x - mu) * jax.lax.rsqrt(var + EPS) * g + b


def _layernorm_ref(x, g, b):
    """Original two-pass formula, used only by the plain-JAX reference."""
    mu = jnp.mean(x, axis=-1, keepdims=True)
    var = jnp.mean((x - mu) ** 2, axis=-1, keepdims=True)
    return (x - mu) * jax.lax.rsqrt(var + EPS) * g + b


def _mm(x, w):
    """bf16-operand matmul with f32 accumulation (MXU-native on v5e/v6e/v7x)."""
    return jnp.dot(x.astype(jnp.bfloat16), w.astype(jnp.bfloat16),
                   preferred_element_type=jnp.float32)


# ---------------------------------------------------------------------------
# Fused kernel: gather -> embed scale/pos-add/mask -> 2 transformer blocks
#               -> head -> (BT, 2) logits
# ---------------------------------------------------------------------------
def sasrec_kernel(ids_ref, negmask_ref, tbl_ref, wsq_ref, vec_ref, out_ref):
    D = HIDDEN
    f32, bf16 = jnp.float32, jnp.bfloat16

    def vrow(i):                     # (1, D) f32 row of the vector stack
        return vec_ref[i:i + 1, :]

    # --- fused embedding gather: ONE one-hot matmul for every lookup --------
    ids = ids_ref[...]                                             # (GROWS, 1)
    col = jax.lax.broadcasted_iota(jnp.int32, (GROWS, TBL_ROWS), 1)
    onehot = (col == ids).astype(bf16)                             # exact 0/1
    g = jnp.dot(onehot, tbl_ref[...], preferred_element_type=f32)  # (GROWS, D)

    log_e = g[0 * BT:1 * BT, :]        # item embeddings of log_seqs
    pos_p = g[1 * BT:2 * BT, :]        # positional embeddings (already bcast)
    pos_e = g[2 * BT:3 * BT, :]        # pos item embeddings (for logits)
    neg_e = g[3 * BT:4 * BT, :]        # neg item embeddings (for logits)
    u_proj = g[4 * BT:5 * BT, :]       # user_emb @ wc2 (pre-folded, per row)
    mask = (ids[0:BT, :] != 0).astype(f32)                         # (BT, 1)

    # TODO(synk): emb_dropout / attention dropout / FFN dropout are identity
    # at inference.
    x = (log_e * (D ** 0.5) + pos_p) * mask

    neg = negmask_ref[...]             # (BT, BT) additive block-causal mask
    scale = 1.0 / math.sqrt(HEAD_DIM)

    for blk in range(NUM_BLOCKS):
        vb, wb = 10 * blk, 6 * blk
        # Q from layernormed seqs, K/V from raw seqs (reference semantics).
        q_in = _layernorm(x, vrow(vb + _LN1G), vrow(vb + _LN1B))
        Q = _mm(q_in, wsq_ref[wb + _WQ]) + vrow(vb + _BQ)          # (BT, D)
        K = _mm(x, wsq_ref[wb + _WK]) + vrow(vb + _BK)             # (BT, D)
        V = _mm(x, wsq_ref[wb + _WV]) + vrow(vb + _BV)             # (BT, D)
        K16, V16 = K.astype(bf16), V.astype(bf16)

        # Per-head attention with zero-masked FULL-width operands: masked
        # lanes contribute 0 to the contraction, so no head lane-slices are
        # needed anywhere on the chain.
        ctx = jnp.zeros((BT, D), f32)
        for h in range(HEADS):
            hm = vrow(_HM0 + h)                                    # (1, D) 0/1
            s = jnp.dot((Q * hm).astype(bf16), K16.T,
                        preferred_element_type=f32) * scale + neg  # f32 scores
            s = s - jnp.max(s, axis=-1, keepdims=True)
            p = jnp.exp(s)
            p = p * pl.reciprocal(jnp.sum(p, axis=-1, keepdims=True),
                                  approx=False)
            ctx = ctx + jnp.dot(p.astype(bf16), V16,
                                preferred_element_type=f32) * hm
        mha = _mm(ctx, wsq_ref[wb + _WO]) + vrow(vb + _BO)

        x = q_in + mha                                             # seqs = Q + mha
        y = _layernorm(x, vrow(vb + _LN2G), vrow(vb + _LN2B))
        # PointWiseFeedForward: conv1d(k=1) -> relu -> conv1d(k=1), residual.
        h1 = jnp.maximum(_mm(y, wsq_ref[wb + _W1]) + vrow(vb + _B1), 0.0)
        h2 = _mm(h1, wsq_ref[wb + _W2]) + vrow(vb + _B2)
        x = (y + h2) * mask                                        # re-apply mask

    # Head: feat = LN(x) @ wc1 + bc + (user_emb @ wc2); one (BT, 2) store.
    lf = _layernorm(x, vrow(_LASTG), vrow(_LASTB))
    feat = _mm(lf, wsq_ref[_WC1]) + vrow(_BC) + u_proj             # (BT, D)
    p_l = jnp.sum(feat * pos_e, axis=-1, keepdims=True)
    n_l = jnp.sum(feat * neg_e, axis=-1, keepdims=True)
    out_ref[...] = jnp.concatenate([p_l, n_l], axis=-1)            # (BT, 2)


# ---------------------------------------------------------------------------
# Parameters, packing, wrapper
# ---------------------------------------------------------------------------
def init_params(key):
    D = HIDDEN
    keys = iter(jax.random.split(key, 64))

    def nrm(shape, scale=0.02):
        return jax.random.normal(next(keys), shape, jnp.float32) * scale

    params = dict(
        item_emb=nrm((ITEM_NUM + 1, D)).at[0].set(0.0),   # padding_idx=0
        user_emb=nrm((USER_NUM + 1, D)),
        pos_emb=nrm((MAXLEN, D)),
        last_g=jnp.ones((1, D), jnp.float32),
        last_b=jnp.zeros((1, D), jnp.float32),
        wc1=nrm((D, D)), wc2=nrm((D, D)), bc=jnp.zeros((1, D), jnp.float32),
        blocks=[],
    )
    for _ in range(NUM_BLOCKS):
        params['blocks'].append(dict(
            ln1_g=jnp.ones((1, D), jnp.float32), ln1_b=jnp.zeros((1, D), jnp.float32),
            wq=nrm((D, D)), bq=jnp.zeros((1, D), jnp.float32),
            wk=nrm((D, D)), bk=jnp.zeros((1, D), jnp.float32),
            wv=nrm((D, D)), bv=jnp.zeros((1, D), jnp.float32),
            wo=nrm((D, D)), bo=jnp.zeros((1, D), jnp.float32),
            ln2_g=jnp.ones((1, D), jnp.float32), ln2_b=jnp.zeros((1, D), jnp.float32),
            w1=nrm((D, D)), b1=jnp.zeros((1, D), jnp.float32),
            w2=nrm((D, D)), b2=jnp.zeros((1, D), jnp.float32),
        ))
    return params


def pack_params(params):
    """Pack parameters into 3 kernel operands: gather table, square-weight
    stack, and vector stack (biases / LN params / head lane-masks)."""
    D = HIDDEN
    wsq, vec = [], []
    for bp in params['blocks']:
        wsq += [bp['wq'], bp['wk'], bp['wv'], bp['wo'], bp['w1'], bp['w2']]
        vec += [bp['ln1_g'], bp['ln1_b'], bp['bq'], bp['bk'], bp['bv'], bp['bo'],
                bp['ln2_g'], bp['ln2_b'], bp['b1'], bp['b2']]
    wsq += [params['wc1']]
    vec += [params['last_g'], params['last_b'], params['bc']]
    # Per-head 0/1 lane masks (used instead of lane slices in the kernel).
    hm = np.zeros((HEADS, D), np.float32)
    for h in range(HEADS):
        hm[h, h * HEAD_DIM:(h + 1) * HEAD_DIM] = 1.0
    vec.append(jnp.asarray(hm))

    # Combined gather table: [item_emb | pos_emb | user_emb @ wc2], zero-padded.
    tbl = jnp.zeros((TBL_ROWS, D), jnp.float32)
    tbl = tbl.at[:ITEM_NUM + 1].set(params['item_emb'])
    tbl = tbl.at[POS_OFF:POS_OFF + MAXLEN].set(params['pos_emb'])
    tbl = tbl.at[USER_OFF:USER_OFF + USER_NUM + 1].set(
        params['user_emb'] @ params['wc2'])      # inference-time fold of wc2

    return (tbl.astype(jnp.bfloat16),                               # (64, D)
            jnp.stack(wsq).astype(jnp.bfloat16),                    # (6*NB+1, D, D)
            jnp.concatenate(vec, axis=0).astype(jnp.float32))       # (10*NB+3+H, D)


@jax.jit
def sasrec_forward(packed, user_ids, log_seqs, pos_seqs, neg_seqs):
    tbl, wsq, vec = packed
    # Only tiny int32 id plumbing happens outside the kernel (no gathers,
    # no (BT, D) activations through HBM).
    ids = jnp.concatenate([
        log_seqs.reshape(-1),                           # rows 0..BT-1
        POS_IDS,                                        # positional rows
        pos_seqs.reshape(-1),                           # pos item rows
        neg_seqs.reshape(-1),                           # neg item rows
        jnp.repeat(user_ids, MAXLEN) + USER_OFF,        # user rows (per step)
    ]).astype(jnp.int32).reshape(GROWS, 1)

    vmem = pltpu.MemorySpace.VMEM
    out = pl.pallas_call(
        sasrec_kernel,
        out_shape=jax.ShapeDtypeStruct((BT, 2), jnp.float32),
        in_specs=[pl.BlockSpec(memory_space=vmem)] * 5,
        out_specs=pl.BlockSpec(memory_space=vmem),
        cost_estimate=pl.CostEstimate(flops=900_000, transcendentals=1_200,
                                      bytes_accessed=36_000),
    )(ids, NEG_MASK, tbl, wsq, vec)

    out = out.reshape(BATCH, MAXLEN, 2)
    return out[..., 0], out[..., 1]


# ---------------------------------------------------------------------------
# Plain-JAX float32 reference (mirrors the PyTorch module) for self-check
# ---------------------------------------------------------------------------
def sasrec_reference(params, user_ids, log_seqs, pos_seqs, neg_seqs):
    D = HIDDEN
    mask = (log_seqs != 0).astype(jnp.float32)[..., None]
    x = params['item_emb'][log_seqs] * (D ** 0.5) + params['pos_emb'][None]
    x = x * mask
    causal = jnp.tril(jnp.ones((MAXLEN, MAXLEN), dtype=bool))
    for bp in params['blocks']:
        q_in = _layernorm_ref(x, bp['ln1_g'], bp['ln1_b'])
        Q = q_in @ bp['wq'] + bp['bq']
        K = x @ bp['wk'] + bp['bk']
        V = x @ bp['wv'] + bp['bv']
        outs = []
        for h in range(HEADS):
            sl = slice(h * HEAD_DIM, (h + 1) * HEAD_DIM)
            s = jnp.einsum('btd,bsd->bts', Q[..., sl], K[..., sl]) / math.sqrt(HEAD_DIM)
            s = jnp.where(causal[None], s, -1e30)
            p = jax.nn.softmax(s, axis=-1)
            outs.append(jnp.einsum('bts,bsd->btd', p, V[..., sl]))
        mha = jnp.concatenate(outs, axis=-1) @ bp['wo'] + bp['bo']
        x = q_in + mha
        y = _layernorm_ref(x, bp['ln2_g'], bp['ln2_b'])
        h1 = jnp.maximum(y @ bp['w1'] + bp['b1'], 0.0)
        x = (y + h1 @ bp['w2'] + bp['b2']) * mask
    lf = _layernorm_ref(x, params['last_g'], params['last_b'])
    ue = params['user_emb'][user_ids][:, None, :]
    feat = lf @ params['wc1'] + ue @ params['wc2'] + params['bc']
    pos_e = params['item_emb'][pos_seqs]
    neg_e = params['item_emb'][neg_seqs]
    return (feat * pos_e).sum(-1), (feat * neg_e).sum(-1)


if __name__ == "__main__":
    key = jax.random.PRNGKey(0)
    k_p, k1, k2, k3, k4 = jax.random.split(key, 5)
    params = init_params(k_p)
    packed = pack_params(params)

    user_ids = jax.random.randint(k1, (BATCH,), 1, USER_NUM + 1)
    log_seqs = jax.random.randint(k2, (BATCH, MAXLEN), 0, ITEM_NUM + 1)  # 0 = pad
    pos_seqs = jax.random.randint(k3, (BATCH, MAXLEN), 1, ITEM_NUM + 1)
    neg_seqs = jax.random.randint(k4, (BATCH, MAXLEN), 1, ITEM_NUM + 1)

    pos_logits, neg_logits = sasrec_forward(packed, user_ids, log_seqs,
                                            pos_seqs, neg_seqs)
    jax.block_until_ready((pos_logits, neg_logits))
    assert pos_logits.shape == (BATCH, MAXLEN)
    assert neg_logits.shape == (BATCH, MAXLEN)

    # Sanity check against a plain-JAX float32 reference (kernel uses bf16
    # matmul operands / bf16 gather table -> loose tolerance).
    ref_pos, ref_neg = sasrec_reference(params, user_ids, log_seqs,
                                        pos_seqs, neg_seqs)
    err = max(float(jnp.max(jnp.abs(pos_logits - ref_pos))),
              float(jnp.max(jnp.abs(neg_logits - ref_neg))))
    assert err < 1e-2, f"kernel/reference mismatch: max abs err {err}"

    print("KERNEL_OK")
</pallas_src>

<mosaic_0001>
module attributes {stable_mosaic.version = 11 : i64} {
  func.func @sasrec_kernel(%arg0: memref<80x1xi32, #tpu.memory_space<vmem>>, %arg1: memref<16x16xf32, #tpu.memory_space<vmem>>, %arg2: memref<64x32xbf16, #tpu.memory_space<vmem>>, %arg3: memref<13x32x32xbf16, #tpu.memory_space<vmem>>, %arg4: memref<25x32xf32, #tpu.memory_space<vmem>>, %arg5: memref<16x2xf32, #tpu.memory_space<vmem>>) attributes {dimension_semantics = [], scalar_prefetch = 0 : i64, scratch_operands = 0 : i64, tpu.core_type = #tpu.core_type<tc>} {
    %c0 = arith.constant 0 : index
    %c0_0 = arith.constant 0 : index
    %0 = vector.load %arg0[%c0, %c0_0] : memref<80x1xi32, #tpu.memory_space<vmem>>, vector<80x1xi32>
    %1 = tpu.iota {dimensions = array<i32: 1>} : vector<80x64xi32>
    %2 = vector.broadcast %0 : vector<80x1xi32> to vector<80x64xi32>
    %3 = arith.cmpi eq, %1, %2 : vector<80x64xi32>
    %4 = arith.extui %3 : vector<80x64xi1> to vector<80x64xi32>
    %5 = arith.sitofp %4 : vector<80x64xi32> to vector<80x64xf32>
    %6 = arith.truncf %5 : vector<80x64xf32> to vector<80x64xbf16>
    %c0_1 = arith.constant 0 : index
    %c0_2 = arith.constant 0 : index
    %7 = vector.load %arg2[%c0_1, %c0_2] : memref<64x32xbf16, #tpu.memory_space<vmem>>, vector<64x32xbf16>
    %cst = arith.constant dense<0.000000e+00> : vector<80x32xf32>
    %8 = tpu.matmul %6, %7, %cst {dimension_numbers = #tpu.dot_dimension_numbers<[1], [0], [0], [1], [0, 0, 1, 1], [], []>} : vector<80x64xbf16>, vector<64x32xbf16>, vector<80x32xf32> -> vector<80x32xf32>
    %9 = vector.extract_strided_slice %8 {offsets = [0, 0], sizes = [16, 32], strides = [1, 1]} : vector<80x32xf32> to vector<16x32xf32>
    %10 = vector.extract_strided_slice %8 {offsets = [16, 0], sizes = [16, 32], strides = [1, 1]} : vector<80x32xf32> to vector<16x32xf32>
    %11 = vector.extract_strided_slice %8 {offsets = [32, 0], sizes = [16, 32], strides = [1, 1]} : vector<80x32xf32> to vector<16x32xf32>
    %12 = vector.extract_strided_slice %8 {offsets = [48, 0], sizes = [16, 32], strides = [1, 1]} : vector<80x32xf32> to vector<16x32xf32>
    %13 = vector.extract_strided_slice %8 {offsets = [64, 0], sizes = [16, 32], strides = [1, 1]} : vector<80x32xf32> to vector<16x32xf32>
    %14 = vector.extract_strided_slice %0 {offsets = [0, 0], sizes = [16, 1], strides = [1, 1]} : vector<80x1xi32> to vector<16x1xi32>
    %c0_i32 = arith.constant 0 : i32
    %15 = vector.broadcast %c0_i32 : i32 to vector<16x1xi32>
    %16 = arith.cmpi ne, %14, %15 : vector<16x1xi32>
    %17 = arith.extui %16 : vector<16x1xi1> to vector<16x1xi32>
    %18 = arith.sitofp %17 : vector<16x1xi32> to vector<16x1xf32>
    %cst_3 = arith.constant 5.65685415 : f32
    %19 = vector.broadcast %cst_3 : f32 to vector<16x32xf32>
    %20 = arith.mulf %9, %19 : vector<16x32xf32>
    %21 = arith.addf %20, %10 : vector<16x32xf32>
    %22 = vector.broadcast %18 : vector<16x1xf32> to vector<16x32xf32>
    %23 = arith.mulf %21, %22 : vector<16x32xf32>
    %c0_4 = arith.constant 0 : index
    %c0_5 = arith.constant 0 : index
    %24 = vector.load %arg1[%c0_4, %c0_5] : memref<16x16xf32, #tpu.memory_space<vmem>>, vector<16x16xf32>
    %c0_6 = arith.constant 0 : index
    %c0_7 = arith.constant 0 : index
    %25 = vector.load %arg4[%c0_6, %c0_7] : memref<25x32xf32, #tpu.memory_space<vmem>>, vector<1x32xf32>
    %c1 = arith.constant 1 : index
    %c0_8 = arith.constant 0 : index
    %26 = vector.load %arg4[%c1, %c0_8] : memref<25x32xf32, #tpu.memory_space<vmem>>, vector<1x32xf32>
    %cst_9 = arith.constant dense<0.000000e+00> : vector<16xf32>
    %27 = vector.multi_reduction <add>, %23, %cst_9 [1] : vector<16x32xf32> to vector<16xf32>
    %28 = vector.shape_cast %27 : vector<16xf32> to vector<16x1xf32>
    %cst_10 = arith.constant 3.200000e+01 : f32
    %29 = vector.broadcast %cst_10 : f32 to vector<16x1xf32>
    %30 = arith.divf %28, %29 : vector<16x1xf32>
    %31 = arith.mulf %23, %23 : vector<16x32xf32>
    %cst_11 = arith.constant dense<0.000000e+00> : vector<16xf32>
    %32 = vector.multi_reduction <add>, %31, %cst_11 [1] : vector<16x32xf32> to vector<16xf32>
    %33 = vector.shape_cast %32 : vector<16xf32> to vector<16x1xf32>
    %cst_12 = arith.constant 3.200000e+01 : f32
    %34 = vector.broadcast %cst_12 : f32 to vector<16x1xf32>
    %35 = arith.divf %33, %34 : vector<16x1xf32>
    %36 = arith.mulf %30, %30 : vector<16x1xf32>
    %37 = arith.subf %35, %36 : vector<16x1xf32>
    %cst_13 = arith.constant 0.000000e+00 : f32
    %38 = vector.broadcast %cst_13 : f32 to vector<16x1xf32>
    %39 = arith.maximumf %37, %38 : vector<16x1xf32>
    %40 = vector.broadcast %30 : vector<16x1xf32> to vector<16x32xf32>
    %41 = arith.subf %23, %40 : vector<16x32xf32>
    %cst_14 = arith.constant 9.99999993E-9 : f32
    %42 = vector.broadcast %cst_14 : f32 to vector<16x1xf32>
    %43 = arith.addf %39, %42 : vector<16x1xf32>
    %44 = math.rsqrt %43 : vector<16x1xf32>
    %45 = vector.broadcast %44 : vector<16x1xf32> to vector<16x32xf32>
    %46 = arith.mulf %41, %45 : vector<16x32xf32>
    %47 = vector.broadcast %25 : vector<1x32xf32> to vector<16x32xf32>
    %48 = arith.mulf %46, %47 : vector<16x32xf32>
    %49 = vector.broadcast %26 : vector<1x32xf32> to vector<16x32xf32>
    %50 = arith.addf %48, %49 : vector<16x32xf32>
    %c0_15 = arith.constant 0 : index
    %c0_16 = arith.constant 0 : index
    %c0_17 = arith.constant 0 : index
    %51 = vector.load %arg3[%c0_15, %c0_16, %c0_17] : memref<13x32x32xbf16, #tpu.memory_space<vmem>>, vector<1x32x32xbf16>
    %52 = vector.shape_cast %51 : vector<1x32x32xbf16> to vector<32x32xbf16>
    %53 = arith.truncf %50 : vector<16x32xf32> to vector<16x32xbf16>
    %cst_18 = arith.constant dense<0.000000e+00> : vector<16x32xf32>
    %54 = tpu.matmul %53, %52, %cst_18 {dimension_numbers = #tpu.dot_dimension_numbers<[1], [0], [0], [1], [0, 0, 1, 1], [], []>} : vector<16x32xbf16>, vector<32x32xbf16>, vector<16x32xf32> -> vector<16x32xf32>
    %c2 = arith.constant 2 : index
    %c0_19 = arith.constant 0 : index
    %55 = vector.load %arg4[%c2, %c0_19] : memref<25x32xf32, #tpu.memory_space<vmem>>, vector<1x32xf32>
    %56 = vector.broadcast %55 : vector<1x32xf32> to vector<16x32xf32>
    %57 = arith.addf %54, %56 : vector<16x32xf32>
    %c1_20 = arith.constant 1 : index
    %c0_21 = arith.constant 0 : index
    %c0_22 = arith.constant 0 : index
    %58 = vector.load %arg3[%c1_20, %c0_21, %c0_22] : memref<13x32x32xbf16, #tpu.memory_space<vmem>>, vector<1x32x32xbf16>
    %59 = vector.shape_cast %58 : vector<1x32x32xbf16> to vector<32x32xbf16>
    %60 = arith.truncf %23 : vector<16x32xf32> to vector<16x32xbf16>
    %cst_23 = arith.constant dense<0.000000e+00> : vector<16x32xf32>
    %61 = tpu.matmul %60, %59, %cst_23 {dimension_numbers = #tpu.dot_dimension_numbers<[1], [0], [0], [1], [0, 0, 1, 1], [], []>} : vector<16x32xbf16>, vector<32x32xbf16>, vector<16x32xf32> -> vector<16x32xf32>
    %c3 = arith.constant 3 : index
    %c0_24 = arith.constant 0 : index
    %62 = vector.load %arg4[%c3, %c0_24] : memref<25x32xf32, #tpu.memory_space<vmem>>, vector<1x32xf32>
    %63 = vector.broadcast %62 : vector<1x32xf32> to vector<16x32xf32>
    %64 = arith.addf %61, %63 : vector<16x32xf32>
    %c2_25 = arith.constant 2 : index
    %c0_26 = arith.constant 0 : index
    %c0_27 = arith.constant 0 : index
    %65 = vector.load %arg3[%c2_25, %c0_26, %c0_27] : memref<13x32x32xbf16, #tpu.memory_space<vmem>>, vector<1x32x32xbf16>
    %66 = vector.shape_cast %65 : vector<1x32x32xbf16> to vector<32x32xbf16>
    %67 = arith.truncf %23 : vector<16x32xf32> to vector<16x32xbf16>
    %cst_28 = arith.constant dense<0.000000e+00> : vector<16x32xf32>
    %68 = tpu.matmul %67, %66, %cst_28 {dimension_numbers = #tpu.dot_dimension_numbers<[1], [0], [0], [1], [0, 0, 1, 1], [], []>} : vector<16x32xbf16>, vector<32x32xbf16>, vector<16x32xf32> -> vector<16x32xf32>
    %c4 = arith.constant 4 : index
    %c0_29 = arith.constant 0 : index
    %69 = vector.load %arg4[%c4, %c0_29] : memref<25x32xf32, #tpu.memory_space<vmem>>, vector<1x32xf32>
    %70 = vector.broadcast %69 : vector<1x32xf32> to vector<16x32xf32>
    %71 = arith.addf %68, %70 : vector<16x32xf32>
    %72 = arith.truncf %64 : vector<16x32xf32> to vector<16x32xbf16>
    %73 = arith.truncf %71 : vector<16x32xf32> to vector<16x32xbf16>
    %cst_30 = arith.constant 0.000000e+00 : f32
    %74 = vector.broadcast %cst_30 : f32 to vector<16x32xf32>
    %c23 = arith.constant 23 : index
    %c0_31 = arith.constant 0 : index
    %75 = vector.load %arg4[%c23, %c0_31] : memref<25x32xf32, #tpu.memory_space<vmem>>, vector<1x32xf32>
    %76 = vector.broadcast %75 : vector<1x32xf32> to vector<16x32xf32>
    %77 = arith.mulf %57, %76 : vector<16x32xf32>
    %78 = arith.truncf %77 : vector<16x32xf32> to vector<16x32xbf16>
    %79 = tpu.transpose %72, [1, 0] : vector<16x32xbf16> -> vector<32x16xbf16>
    %cst_32 = arith.constant dense<0.000000e+00> : vector<16x16xf32>
    %80 = tpu.matmul %78, %79, %cst_32 {dimension_numbers = #tpu.dot_dimension_numbers<[1], [0], [0], [1], [0, 0, 1, 1], [], []>} : vector<16x32xbf16>, vector<32x16xbf16>, vector<16x16xf32> -> vector<16x16xf32>
    %cst_33 = arith.constant 2.500000e-01 : f32
    %81 = vector.broadcast %cst_33 : f32 to vector<16x16xf32>
    %82 = arith.mulf %80, %81 : vector<16x16xf32>
    %83 = arith.addf %82, %24 : vector<16x16xf32>
    %cst_34 = arith.constant dense<0xFF800000> : vector<16xf32>
    %84 = vector.multi_reduction <maximumf>, %83, %cst_34 [1] : vector<16x16xf32> to vector<16xf32>
    %85 = vector.shape_cast %84 : vector<16xf32> to vector<16x1xf32>
    %86 = vector.broadcast %85 : vector<16x1xf32> to vector<16x16xf32>
    %87 = arith.subf %83, %86 : vector<16x16xf32>
    %88 = math.exp %87 : vector<16x16xf32>
    %cst_35 = arith.constant dense<0.000000e+00> : vector<16xf32>
    %89 = vector.multi_reduction <add>, %88, %cst_35 [1] : vector<16x16xf32> to vector<16xf32>
    %90 = vector.shape_cast %89 : vector<16xf32> to vector<16x1xf32>
    %91 = tpu.reciprocal %90 : vector<16x1xf32> -> vector<16x1xf32>
    %92 = vector.broadcast %91 : vector<16x1xf32> to vector<16x16xf32>
    %93 = arith.mulf %88, %92 : vector<16x16xf32>
    %94 = arith.truncf %93 : vector<16x16xf32> to vector<16x16xbf16>
    %cst_36 = arith.constant dense<0.000000e+00> : vector<16x32xf32>
    %95 = tpu.matmul %94, %73, %cst_36 {dimension_numbers = #tpu.dot_dimension_numbers<[1], [0], [0], [1], [0, 0, 1, 1], [], []>} : vector<16x16xbf16>, vector<16x32xbf16>, vector<16x32xf32> -> vector<16x32xf32>
    %96 = vector.broadcast %75 : vector<1x32xf32> to vector<16x32xf32>
    %97 = arith.mulf %95, %96 : vector<16x32xf32>
    %98 = arith.addf %74, %97 : vector<16x32xf32>
    %c24 = arith.constant 24 : index
    %c0_37 = arith.constant 0 : index
    %99 = vector.load %arg4[%c24, %c0_37] : memref<25x32xf32, #tpu.memory_space<vmem>>, vector<1x32xf32>
    %100 = vector.broadcast %99 : vector<1x32xf32> to vector<16x32xf32>
    %101 = arith.mulf %57, %100 : vector<16x32xf32>
    %102 = arith.truncf %101 : vector<16x32xf32> to vector<16x32xbf16>
    %103 = tpu.transpose %72, [1, 0] : vector<16x32xbf16> -> vector<32x16xbf16>
    %cst_38 = arith.constant dense<0.000000e+00> : vector<16x16xf32>
    %104 = tpu.matmul %102, %103, %cst_38 {dimension_numbers = #tpu.dot_dimension_numbers<[1], [0], [0], [1], [0, 0, 1, 1], [], []>} : vector<16x32xbf16>, vector<32x16xbf16>, vector<16x16xf32> -> vector<16x16xf32>
    %cst_39 = arith.constant 2.500000e-01 : f32
    %105 = vector.broadcast %cst_39 : f32 to vector<16x16xf32>
    %106 = arith.mulf %104, %105 : vector<16x16xf32>
    %107 = arith.addf %106, %24 : vector<16x16xf32>
    %cst_40 = arith.constant dense<0xFF800000> : vector<16xf32>
    %108 = vector.multi_reduction <maximumf>, %107, %cst_40 [1] : vector<16x16xf32> to vector<16xf32>
    %109 = vector.shape_cast %108 : vector<16xf32> to vector<16x1xf32>
    %110 = vector.broadcast %109 : vector<16x1xf32> to vector<16x16xf32>
    %111 = arith.subf %107, %110 : vector<16x16xf32>
    %112 = math.exp %111 : vector<16x16xf32>
    %cst_41 = arith.constant dense<0.000000e+00> : vector<16xf32>
    %113 = vector.multi_reduction <add>, %112, %cst_41 [1] : vector<16x16xf32> to vector<16xf32>
    %114 = vector.shape_cast %113 : vector<16xf32> to vector<16x1xf32>
    %115 = tpu.reciprocal %114 : vector<16x1xf32> -> vector<16x1xf32>
    %116 = vector.broadcast %115 : vector<16x1xf32> to vector<16x16xf32>
    %117 = arith.mulf %112, %116 : vector<16x16xf32>
    %118 = arith.truncf %117 : vector<16x16xf32> to vector<16x16xbf16>
    %cst_42 = arith.constant dense<0.000000e+00> : vector<16x32xf32>
    %119 = tpu.matmul %118, %73, %cst_42 {dimension_numbers = #tpu.dot_dimension_numbers<[1], [0], [0], [1], [0, 0, 1, 1], [], []>} : vector<16x16xbf16>, vector<16x32xbf16>, vector<16x32xf32> -> vector<16x32xf32>
    %120 = vector.broadcast %99 : vector<1x32xf32> to vector<16x32xf32>
    %121 = arith.mulf %119, %120 : vector<16x32xf32>
    %122 = arith.addf %98, %121 : vector<16x32xf32>
    %c3_43 = arith.constant 3 : index
    %c0_44 = arith.constant 0 : index
    %c0_45 = arith.constant 0 : index
    %123 = vector.load %arg3[%c3_43, %c0_44, %c0_45] : memref<13x32x32xbf16, #tpu.memory_space<vmem>>, vector<1x32x32xbf16>
    %124 = vector.shape_cast %123 : vector<1x32x32xbf16> to vector<32x32xbf16>
    %125 = arith.truncf %122 : vector<16x32xf32> to vector<16x32xbf16>
    %cst_46 = arith.constant dense<0.000000e+00> : vector<16x32xf32>
    %126 = tpu.matmul %125, %124, %cst_46 {dimension_numbers = #tpu.dot_dimension_numbers<[1], [0], [0], [1], [0, 0, 1, 1], [], []>} : vector<16x32xbf16>, vector<32x32xbf16>, vector<16x32xf32> -> vector<16x32xf32>
    %c5 = arith.constant 5 : index
    %c0_47 = arith.constant 0 : index
    %127 = vector.load %arg4[%c5, %c0_47] : memref<25x32xf32, #tpu.memory_space<vmem>>, vector<1x32xf32>
    %128 = vector.broadcast %127 : vector<1x32xf32> to vector<16x32xf32>
    %129 = arith.addf %126, %128 : vector<16x32xf32>
    %130 = arith.addf %50, %129 : vector<16x32xf32>
    %c6 = arith.constant 6 : index
    %c0_48 = arith.constant 0 : index
    %131 = vector.load %arg4[%c6, %c0_48] : memref<25x32xf32, #tpu.memory_space<vmem>>, vector<1x32xf32>
    %c7 = arith.constant 7 : index
    %c0_49 = arith.constant 0 : index
    %132 = vector.load %arg4[%c7, %c0_49] : memref<25x32xf32, #tpu.memory_space<vmem>>, vector<1x32xf32>
    %cst_50 = arith.constant dense<0.000000e+00> : vector<16xf32>
    %133 = vector.multi_reduction <add>, %130, %cst_50 [1] : vector<16x32xf32> to vector<16xf32>
    %134 = vector.shape_cast %133 : vector<16xf32> to vector<16x1xf32>
    %cst_51 = arith.constant 3.200000e+01 : f32
    %135 = vector.broadcast %cst_51 : f32 to vector<16x1xf32>
    %136 = arith.divf %134, %135 : vector<16x1xf32>
    %137 = arith.mulf %130, %130 : vector<16x32xf32>
    %cst_52 = arith.constant dense<0.000000e+00> : vector<16xf32>
    %138 = vector.multi_reduction <add>, %137, %cst_52 [1] : vector<16x32xf32> to vector<16xf32>
    %139 = vector.shape_cast %138 : vector<16xf32> to vector<16x1xf32>
    %cst_53 = arith.constant 3.200000e+01 : f32
    %140 = vector.broadcast %cst_53 : f32 to vector<16x1xf32>
    %141 = arith.divf %139, %140 : vector<16x1xf32>
    %142 = arith.mulf %136, %136 : vector<16x1xf32>
    %143 = arith.subf %141, %142 : vector<16x1xf32>
    %cst_54 = arith.constant 0.000000e+00 : f32
    %144 = vector.broadcast %cst_54 : f32 to vector<16x1xf32>
    %145 = arith.maximumf %143, %144 : vector<16x1xf32>
    %146 = vector.broadcast %136 : vector<16x1xf32> to vector<16x32xf32>
    %147 = arith.subf %130, %146 : vector<16x32xf32>
    %cst_55 = arith.constant 9.99999993E-9 : f32
    %148 = vector.broadcast %cst_55 : f32 to vector<16x1xf32>
    %149 = arith.addf %145, %148 : vector<16x1xf32>
    %150 = math.rsqrt %149 : vector<16x1xf32>
    %151 = vector.broadcast %150 : vector<16x1xf32> to vector<16x32xf32>
    %152 = arith.mulf %147, %151 : vector<16x32xf32>
    %153 = vector.broadcast %131 : vector<1x32xf32> to vector<16x32xf32>
    %154 = arith.mulf %152, %153 : vector<16x32xf32>
    %155 = vector.broadcast %132 : vector<1x32xf32> to vector<16x32xf32>
    %156 = arith.addf %154, %155 : vector<16x32xf32>
    %c4_56 = arith.constant 4 : index
    %c0_57 = arith.constant 0 : index
    %c0_58 = arith.constant 0 : index
    %157 = vector.load %arg3[%c4_56, %c0_57, %c0_58] : memref<13x32x32xbf16, #tpu.memory_space<vmem>>, vector<1x32x32xbf16>
    %158 = vector.shape_cast %157 : vector<1x32x32xbf16> to vector<32x32xbf16>
    %159 = arith.truncf %156 : vector<16x32xf32> to vector<16x32xbf16>
    %cst_59 = arith.constant dense<0.000000e+00> : vector<16x32xf32>
    %160 = tpu.matmul %159, %158, %cst_59 {dimension_numbers = #tpu.dot_dimension_numbers<[1], [0], [0], [1], [0, 0, 1, 1], [], []>} : vector<16x32xbf16>, vector<32x32xbf16>, vector<16x32xf32> -> vector<16x32xf32>
    %c8 = arith.constant 8 : index
    %c0_60 = arith.constant 0 : index
    %161 = vector.load %arg4[%c8, %c0_60] : memref<25x32xf32, #tpu.memory_space<vmem>>, vector<1x32xf32>
    %162 = vector.broadcast %161 : vector<1x32xf32> to vector<16x32xf32>
    %163 = arith.addf %160, %162 : vector<16x32xf32>
    %cst_61 = arith.constant 0.000000e+00 : f32
    %164 = vector.broadcast %cst_61 : f32 to vector<16x32xf32>
    %165 = arith.maximumf %163, %164 : vector<16x32xf32>
    %c5_62 = arith.constant 5 : index
    %c0_63 = arith.constant 0 : index
    %c0_64 = arith.constant 0 : index
    %166 = vector.load %arg3[%c5_62, %c0_63, %c0_64] : memref<13x32x32xbf16, #tpu.memory_space<vmem>>, vector<1x32x32xbf16>
    %167 = vector.shape_cast %166 : vector<1x32x32xbf16> to vector<32x32xbf16>
    %168 = arith.truncf %165 : vector<16x32xf32> to vector<16x32xbf16>
    %cst_65 = arith.constant dense<0.000000e+00> : vector<16x32xf32>
    %169 = tpu.matmul %168, %167, %cst_65 {dimension_numbers = #tpu.dot_dimension_numbers<[1], [0], [0], [1], [0, 0, 1, 1], [], []>} : vector<16x32xbf16>, vector<32x32xbf16>, vector<16x32xf32> -> vector<16x32xf32>
    %c9 = arith.constant 9 : index
    %c0_66 = arith.constant 0 : index
    %170 = vector.load %arg4[%c9, %c0_66] : memref<25x32xf32, #tpu.memory_space<vmem>>, vector<1x32xf32>
    %171 = vector.broadcast %170 : vector<1x32xf32> to vector<16x32xf32>
    %172 = arith.addf %169, %171 : vector<16x32xf32>
    %173 = arith.addf %156, %172 : vector<16x32xf32>
    %174 = vector.broadcast %18 : vector<16x1xf32> to vector<16x32xf32>
    %175 = arith.mulf %173, %174 : vector<16x32xf32>
    %c10 = arith.constant 10 : index
    %c0_67 = arith.constant 0 : index
    %176 = vector.load %arg4[%c10, %c0_67] : memref<25x32xf32, #tpu.memory_space<vmem>>, vector<1x32xf32>
    %c11 = arith.constant 11 : index
    %c0_68 = arith.constant 0 : index
    %177 = vector.load %arg4[%c11, %c0_68] : memref<25x32xf32, #tpu.memory_space<vmem>>, vector<1x32xf32>
    %cst_69 = arith.constant dense<0.000000e+00> : vector<16xf32>
    %178 = vector.multi_reduction <add>, %175, %cst_69 [1] : vector<16x32xf32> to vector<16xf32>
    %179 = vector.shape_cast %178 : vector<16xf32> to vector<16x1xf32>
    %cst_70 = arith.constant 3.200000e+01 : f32
    %180 = vector.broadcast %cst_70 : f32 to vector<16x1xf32>
    %181 = arith.divf %179, %180 : vector<16x1xf32>
    %182 = arith.mulf %175, %175 : vector<16x32xf32>
    %cst_71 = arith.constant dense<0.000000e+00> : vector<16xf32>
    %183 = vector.multi_reduction <add>, %182, %cst_71 [1] : vector<16x32xf32> to vector<16xf32>
    %184 = vector.shape_cast %183 : vector<16xf32> to vector<16x1xf32>
    %cst_72 = arith.constant 3.200000e+01 : f32
    %185 = vector.broadcast %cst_72 : f32 to vector<16x1xf32>
    %186 = arith.divf %184, %185 : vector<16x1xf32>
    %187 = arith.mulf %181, %181 : vector<16x1xf32>
    %188 = arith.subf %186, %187 : vector<16x1xf32>
    %cst_73 = arith.constant 0.000000e+00 : f32
    %189 = vector.broadcast %cst_73 : f32 to vector<16x1xf32>
    %190 = arith.maximumf %188, %189 : vector<16x1xf32>
    %191 = vector.broadcast %181 : vector<16x1xf32> to vector<16x32xf32>
    %192 = arith.subf %175, %191 : vector<16x32xf32>
    %cst_74 = arith.constant 9.99999993E-9 : f32
    %193 = vector.broadcast %cst_74 : f32 to vector<16x1xf32>
    %194 = arith.addf %190, %193 : vector<16x1xf32>
    %195 = math.rsqrt %194 : vector<16x1xf32>
    %196 = vector.broadcast %195 : vector<16x1xf32> to vector<16x32xf32>
    %197 = arith.mulf %192, %196 : vector<16x32xf32>
    %198 = vector.broadcast %176 : vector<1x32xf32> to vector<16x32xf32>
    %199 = arith.mulf %197, %198 : vector<16x32xf32>
    %200 = vector.broadcast %177 : vector<1x32xf32> to vector<16x32xf32>
    %201 = arith.addf %199, %200 : vector<16x32xf32>
    %c6_75 = arith.constant 6 : index
    %c0_76 = arith.constant 0 : index
    %c0_77 = arith.constant 0 : index
    %202 = vector.load %arg3[%c6_75, %c0_76, %c0_77] : memref<13x32x32xbf16, #tpu.memory_space<vmem>>, vector<1x32x32xbf16>
    %203 = vector.shape_cast %202 : vector<1x32x32xbf16> to vector<32x32xbf16>
    %204 = arith.truncf %201 : vector<16x32xf32> to vector<16x32xbf16>
    %cst_78 = arith.constant dense<0.000000e+00> : vector<16x32xf32>
    %205 = tpu.matmul %204, %203, %cst_78 {dimension_numbers = #tpu.dot_dimension_numbers<[1], [0], [0], [1], [0, 0, 1, 1], [], []>} : vector<16x32xbf16>, vector<32x32xbf16>, vector<16x32xf32> -> vector<16x32xf32>
    %c12 = arith.constant 12 : index
    %c0_79 = arith.constant 0 : index
    %206 = vector.load %arg4[%c12, %c0_79] : memref<25x32xf32, #tpu.memory_space<vmem>>, vector<1x32xf32>
    %207 = vector.broadcast %206 : vector<1x32xf32> to vector<16x32xf32>
    %208 = arith.addf %205, %207 : vector<16x32xf32>
    %c7_80 = arith.constant 7 : index
    %c0_81 = arith.constant 0 : index
    %c0_82 = arith.constant 0 : index
    %209 = vector.load %arg3[%c7_80, %c0_81, %c0_82] : memref<13x32x32xbf16, #tpu.memory_space<vmem>>, vector<1x32x32xbf16>
    %210 = vector.shape_cast %209 : vector<1x32x32xbf16> to vector<32x32xbf16>
    %211 = arith.truncf %175 : vector<16x32xf32> to vector<16x32xbf16>
    %cst_83 = arith.constant dense<0.000000e+00> : vector<16x32xf32>
    %212 = tpu.matmul %211, %210, %cst_83 {dimension_numbers = #tpu.dot_dimension_numbers<[1], [0], [0], [1], [0, 0, 1, 1], [], []>} : vector<16x32xbf16>, vector<32x32xbf16>, vector<16x32xf32> -> vector<16x32xf32>
    %c13 = arith.constant 13 : index
    %c0_84 = arith.constant 0 : index
    %213 = vector.load %arg4[%c13, %c0_84] : memref<25x32xf32, #tpu.memory_space<vmem>>, vector<1x32xf32>
    %214 = vector.broadcast %213 : vector<1x32xf32> to vector<16x32xf32>
    %215 = arith.addf %212, %214 : vector<16x32xf32>
    %c8_85 = arith.constant 8 : index
    %c0_86 = arith.constant 0 : index
    %c0_87 = arith.constant 0 : index
    %216 = vector.load %arg3[%c8_85, %c0_86, %c0_87] : memref<13x32x32xbf16, #tpu.memory_space<vmem>>, vector<1x32x32xbf16>
    %217 = vector.shape_cast %216 : vector<1x32x32xbf16> to vector<32x32xbf16>
    %218 = arith.truncf %175 : vector<16x32xf32> to vector<16x32xbf16>
    %cst_88 = arith.constant dense<0.000000e+00> : vector<16x32xf32>
    %219 = tpu.matmul %218, %217, %cst_88 {dimension_numbers = #tpu.dot_dimension_numbers<[1], [0], [0], [1], [0, 0, 1, 1], [], []>} : vector<16x32xbf16>, vector<32x32xbf16>, vector<16x32xf32> -> vector<16x32xf32>
    %c14 = arith.constant 14 : index
    %c0_89 = arith.constant 0 : index
    %220 = vector.load %arg4[%c14, %c0_89] : memref<25x32xf32, #tpu.memory_space<vmem>>, vector<1x32xf32>
    %221 = vector.broadcast %220 : vector<1x32xf32> to vector<16x32xf32>
    %222 = arith.addf %219, %221 : vector<16x32xf32>
    %223 = arith.truncf %215 : vector<16x32xf32> to vector<16x32xbf16>
    %224 = arith.truncf %222 : vector<16x32xf32> to vector<16x32xbf16>
    %cst_90 = arith.constant 0.000000e+00 : f32
    %225 = vector.broadcast %cst_90 : f32 to vector<16x32xf32>
    %c23_91 = arith.constant 23 : index
    %c0_92 = arith.constant 0 : index
    %226 = vector.load %arg4[%c23_91, %c0_92] : memref<25x32xf32, #tpu.memory_space<vmem>>, vector<1x32xf32>
    %227 = vector.broadcast %226 : vector<1x32xf32> to vector<16x32xf32>
    %228 = arith.mulf %208, %227 : vector<16x32xf32>
    %229 = arith.truncf %228 : vector<16x32xf32> to vector<16x32xbf16>
    %230 = tpu.transpose %223, [1, 0] : vector<16x32xbf16> -> vector<32x16xbf16>
    %cst_93 = arith.constant dense<0.000000e+00> : vector<16x16xf32>
    %231 = tpu.matmul %229, %230, %cst_93 {dimension_numbers = #tpu.dot_dimension_numbers<[1], [0], [0], [1], [0, 0, 1, 1], [], []>} : vector<16x32xbf16>, vector<32x16xbf16>, vector<16x16xf32> -> vector<16x16xf32>
    %cst_94 = arith.constant 2.500000e-01 : f32
    %232 = vector.broadcast %cst_94 : f32 to vector<16x16xf32>
    %233 = arith.mulf %231, %232 : vector<16x16xf32>
    %234 = arith.addf %233, %24 : vector<16x16xf32>
    %cst_95 = arith.constant dense<0xFF800000> : vector<16xf32>
    %235 = vector.multi_reduction <maximumf>, %234, %cst_95 [1] : vector<16x16xf32> to vector<16xf32>
    %236 = vector.shape_cast %235 : vector<16xf32> to vector<16x1xf32>
    %237 = vector.broadcast %236 : vector<16x1xf32> to vector<16x16xf32>
    %238 = arith.subf %234, %237 : vector<16x16xf32>
    %239 = math.exp %238 : vector<16x16xf32>
    %cst_96 = arith.constant dense<0.000000e+00> : vector<16xf32>
    %240 = vector.multi_reduction <add>, %239, %cst_96 [1] : vector<16x16xf32> to vector<16xf32>
    %241 = vector.shape_cast %240 : vector<16xf32> to vector<16x1xf32>
    %242 = tpu.reciprocal %241 : vector<16x1xf32> -> vector<16x1xf32>
    %243 = vector.broadcast %242 : vector<16x1xf32> to vector<16x16xf32>
    %244 = arith.mulf %239, %243 : vector<16x16xf32>
    %245 = arith.truncf %244 : vector<16x16xf32> to vector<16x16xbf16>
    %cst_97 = arith.constant dense<0.000000e+00> : vector<16x32xf32>
    %246 = tpu.matmul %245, %224, %cst_97 {dimension_numbers = #tpu.dot_dimension_numbers<[1], [0], [0], [1], [0, 0, 1, 1], [], []>} : vector<16x16xbf16>, vector<16x32xbf16>, vector<16x32xf32> -> vector<16x32xf32>
    %247 = vector.broadcast %226 : vector<1x32xf32> to vector<16x32xf32>
    %248 = arith.mulf %246, %247 : vector<16x32xf32>
    %249 = arith.addf %225, %248 : vector<16x32xf32>
    %c24_98 = arith.constant 24 : index
    %c0_99 = arith.constant 0 : index
    %250 = vector.load %arg4[%c24_98, %c0_99] : memref<25x32xf32, #tpu.memory_space<vmem>>, vector<1x32xf32>
    %251 = vector.broadcast %250 : vector<1x32xf32> to vector<16x32xf32>
    %252 = arith.mulf %208, %251 : vector<16x32xf32>
    %253 = arith.truncf %252 : vector<16x32xf32> to vector<16x32xbf16>
    %254 = tpu.transpose %223, [1, 0] : vector<16x32xbf16> -> vector<32x16xbf16>
    %cst_100 = arith.constant dense<0.000000e+00> : vector<16x16xf32>
    %255 = tpu.matmul %253, %254, %cst_100 {dimension_numbers = #tpu.dot_dimension_numbers<[1], [0], [0], [1], [0, 0, 1, 1], [], []>} : vector<16x32xbf16>, vector<32x16xbf16>, vector<16x16xf32> -> vector<16x16xf32>
    %cst_101 = arith.constant 2.500000e-01 : f32
    %256 = vector.broadcast %cst_101 : f32 to vector<16x16xf32>
    %257 = arith.mulf %255, %256 : vector<16x16xf32>
    %258 = arith.addf %257, %24 : vector<16x16xf32>
    %cst_102 = arith.constant dense<0xFF800000> : vector<16xf32>
    %259 = vector.multi_reduction <maximumf>, %258, %cst_102 [1] : vector<16x16xf32> to vector<16xf32>
    %260 = vector.shape_cast %259 : vector<16xf32> to vector<16x1xf32>
    %261 = vector.broadcast %260 : vector<16x1xf32> to vector<16x16xf32>
    %262 = arith.subf %258, %261 : vector<16x16xf32>
    %263 = math.exp %262 : vector<16x16xf32>
    %cst_103 = arith.constant dense<0.000000e+00> : vector<16xf32>
    %264 = vector.multi_reduction <add>, %263, %cst_103 [1] : vector<16x16xf32> to vector<16xf32>
    %265 = vector.shape_cast %264 : vector<16xf32> to vector<16x1xf32>
    %266 = tpu.reciprocal %265 : vector<16x1xf32> -> vector<16x1xf32>
    %267 = vector.broadcast %266 : vector<16x1xf32> to vector<16x16xf32>
    %268 = arith.mulf %263, %267 : vector<16x16xf32>
    %269 = arith.truncf %268 : vector<16x16xf32> to vector<16x16xbf16>
    %cst_104 = arith.constant dense<0.000000e+00> : vector<16x32xf32>
    %270 = tpu.matmul %269, %224, %cst_104 {dimension_numbers = #tpu.dot_dimension_numbers<[1], [0], [0], [1], [0, 0, 1, 1], [], []>} : vector<16x16xbf16>, vector<16x32xbf16>, vector<16x32xf32> -> vector<16x32xf32>
    %271 = vector.broadcast %250 : vector<1x32xf32> to vector<16x32xf32>
    %272 = arith.mulf %270, %271 : vector<16x32xf32>
    %273 = arith.addf %249, %272 : vector<16x32xf32>
    %c9_105 = arith.constant 9 : index
    %c0_106 = arith.constant 0 : index
    %c0_107 = arith.constant 0 : index
    %274 = vector.load %arg3[%c9_105, %c0_106, %c0_107] : memref<13x32x32xbf16, #tpu.memory_space<vmem>>, vector<1x32x32xbf16>
    %275 = vector.shape_cast %274 : vector<1x32x32xbf16> to vector<32x32xbf16>
    %276 = arith.truncf %273 : vector<16x32xf32> to vector<16x32xbf16>
    %cst_108 = arith.constant dense<0.000000e+00> : vector<16x32xf32>
    %277 = tpu.matmul %276, %275, %cst_108 {dimension_numbers = #tpu.dot_dimension_numbers<[1], [0], [0], [1], [0, 0, 1, 1], [], []>} : vector<16x32xbf16>, vector<32x32xbf16>, vector<16x32xf32> -> vector<16x32xf32>
    %c15 = arith.constant 15 : index
    %c0_109 = arith.constant 0 : index
    %278 = vector.load %arg4[%c15, %c0_109] : memref<25x32xf32, #tpu.memory_space<vmem>>, vector<1x32xf32>
    %279 = vector.broadcast %278 : vector<1x32xf32> to vector<16x32xf32>
    %280 = arith.addf %277, %279 : vector<16x32xf32>
    %281 = arith.addf %201, %280 : vector<16x32xf32>
    %c16 = arith.constant 16 : index
    %c0_110 = arith.constant 0 : index
    %282 = vector.load %arg4[%c16, %c0_110] : memref<25x32xf32, #tpu.memory_space<vmem>>, vector<1x32xf32>
    %c17 = arith.constant 17 : index
    %c0_111 = arith.constant 0 : index
    %283 = vector.load %arg4[%c17, %c0_111] : memref<25x32xf32, #tpu.memory_space<vmem>>, vector<1x32xf32>
    %cst_112 = arith.constant dense<0.000000e+00> : vector<16xf32>
    %284 = vector.multi_reduction <add>, %281, %cst_112 [1] : vector<16x32xf32> to vector<16xf32>
    %285 = vector.shape_cast %284 : vector<16xf32> to vector<16x1xf32>
    %cst_113 = arith.constant 3.200000e+01 : f32
    %286 = vector.broadcast %cst_113 : f32 to vector<16x1xf32>
    %287 = arith.divf %285, %286 : vector<16x1xf32>
    %288 = arith.mulf %281, %281 : vector<16x32xf32>
    %cst_114 = arith.constant dense<0.000000e+00> : vector<16xf32>
    %289 = vector.multi_reduction <add>, %288, %cst_114 [1] : vector<16x32xf32> to vector<16xf32>
    %290 = vector.shape_cast %289 : vector<16xf32> to vector<16x1xf32>
    %cst_115 = arith.constant 3.200000e+01 : f32
    %291 = vector.broadcast %cst_115 : f32 to vector<16x1xf32>
    %292 = arith.divf %290, %291 : vector<16x1xf32>
    %293 = arith.mulf %287, %287 : vector<16x1xf32>
    %294 = arith.subf %292, %293 : vector<16x1xf32>
    %cst_116 = arith.constant 0.000000e+00 : f32
    %295 = vector.broadcast %cst_116 : f32 to vector<16x1xf32>
    %296 = arith.maximumf %294, %295 : vector<16x1xf32>
    %297 = vector.broadcast %287 : vector<16x1xf32> to vector<16x32xf32>
    %298 = arith.subf %281, %297 : vector<16x32xf32>
    %cst_117 = arith.constant 9.99999993E-9 : f32
    %299 = vector.broadcast %cst_117 : f32 to vector<16x1xf32>
    %300 = arith.addf %296, %299 : vector<16x1xf32>
    %301 = math.rsqrt %300 : vector<16x1xf32>
    %302 = vector.broadcast %301 : vector<16x1xf32> to vector<16x32xf32>
    %303 = arith.mulf %298, %302 : vector<16x32xf32>
    %304 = vector.broadcast %282 : vector<1x32xf32> to vector<16x32xf32>
    %305 = arith.mulf %303, %304 : vector<16x32xf32>
    %306 = vector.broadcast %283 : vector<1x32xf32> to vector<16x32xf32>
    %307 = arith.addf %305, %306 : vector<16x32xf32>
    %c10_118 = arith.constant 10 : index
    %c0_119 = arith.constant 0 : index
    %c0_120 = arith.constant 0 : index
    %308 = vector.load %arg3[%c10_118, %c0_119, %c0_120] : memref<13x32x32xbf16, #tpu.memory_space<vmem>>, vector<1x32x32xbf16>
    %309 = vector.shape_cast %308 : vector<1x32x32xbf16> to vector<32x32xbf16>
    %310 = arith.truncf %307 : vector<16x32xf32> to vector<16x32xbf16>
    %cst_121 = arith.constant dense<0.000000e+00> : vector<16x32xf32>
    %311 = tpu.matmul %310, %309, %cst_121 {dimension_numbers = #tpu.dot_dimension_numbers<[1], [0], [0], [1], [0, 0, 1, 1], [], []>} : vector<16x32xbf16>, vector<32x32xbf16>, vector<16x32xf32> -> vector<16x32xf32>
    %c18 = arith.constant 18 : index
    %c0_122 = arith.constant 0 : index
    %312 = vector.load %arg4[%c18, %c0_122] : memref<25x32xf32, #tpu.memory_space<vmem>>, vector<1x32xf32>
    %313 = vector.broadcast %312 : vector<1x32xf32> to vector<16x32xf32>
    %314 = arith.addf %311, %313 : vector<16x32xf32>
    %cst_123 = arith.constant 0.000000e+00 : f32
    %315 = vector.broadcast %cst_123 : f32 to vector<16x32xf32>
    %316 = arith.maximumf %314, %315 : vector<16x32xf32>
    %c11_124 = arith.constant 11 : index
    %c0_125 = arith.constant 0 : index
    %c0_126 = arith.constant 0 : index
    %317 = vector.load %arg3[%c11_124, %c0_125, %c0_126] : memref<13x32x32xbf16, #tpu.memory_space<vmem>>, vector<1x32x32xbf16>
    %318 = vector.shape_cast %317 : vector<1x32x32xbf16> to vector<32x32xbf16>
    %319 = arith.truncf %316 : vector<16x32xf32> to vector<16x32xbf16>
    %cst_127 = arith.constant dense<0.000000e+00> : vector<16x32xf32>
    %320 = tpu.matmul %319, %318, %cst_127 {dimension_numbers = #tpu.dot_dimension_numbers<[1], [0], [0], [1], [0, 0, 1, 1], [], []>} : vector<16x32xbf16>, vector<32x32xbf16>, vector<16x32xf32> -> vector<16x32xf32>
    %c19 = arith.constant 19 : index
    %c0_128 = arith.constant 0 : index
    %321 = vector.load %arg4[%c19, %c0_128] : memref<25x32xf32, #tpu.memory_space<vmem>>, vector<1x32xf32>
    %322 = vector.broadcast %321 : vector<1x32xf32> to vector<16x32xf32>
    %323 = arith.addf %320, %322 : vector<16x32xf32>
    %324 = arith.addf %307, %323 : vector<16x32xf32>
    %325 = vector.broadcast %18 : vector<16x1xf32> to vector<16x32xf32>
    %326 = arith.mulf %324, %325 : vector<16x32xf32>
    %c20 = arith.constant 20 : index
    %c0_129 = arith.constant 0 : index
    %327 = vector.load %arg4[%c20, %c0_129] : memref<25x32xf32, #tpu.memory_space<vmem>>, vector<1x32xf32>
    %c21 = arith.constant 21 : index
    %c0_130 = arith.constant 0 : index
    %328 = vector.load %arg4[%c21, %c0_130] : memref<25x32xf32, #tpu.memory_space<vmem>>, vector<1x32xf32>
    %cst_131 = arith.constant dense<0.000000e+00> : vector<16xf32>
    %329 = vector.multi_reduction <add>, %326, %cst_131 [1] : vector<16x32xf32> to vector<16xf32>
    %330 = vector.shape_cast %329 : vector<16xf32> to vector<16x1xf32>
    %cst_132 = arith.constant 3.200000e+01 : f32
    %331 = vector.broadcast %cst_132 : f32 to vector<16x1xf32>
    %332 = arith.divf %330, %331 : vector<16x1xf32>
    %333 = arith.mulf %326, %326 : vector<16x32xf32>
    %cst_133 = arith.constant dense<0.000000e+00> : vector<16xf32>
    %334 = vector.multi_reduction <add>, %333, %cst_133 [1] : vector<16x32xf32> to vector<16xf32>
    %335 = vector.shape_cast %334 : vector<16xf32> to vector<16x1xf32>
    %cst_134 = arith.constant 3.200000e+01 : f32
    %336 = vector.broadcast %cst_134 : f32 to vector<16x1xf32>
    %337 = arith.divf %335, %336 : vector<16x1xf32>
    %338 = arith.mulf %332, %332 : vector<16x1xf32>
    %339 = arith.subf %337, %338 : vector<16x1xf32>
    %cst_135 = arith.constant 0.000000e+00 : f32
    %340 = vector.broadcast %cst_135 : f32 to vector<16x1xf32>
    %341 = arith.maximumf %339, %340 : vector<16x1xf32>
    %342 = vector.broadcast %332 : vector<16x1xf32> to vector<16x32xf32>
    %343 = arith.subf %326, %342 : vector<16x32xf32>
    %cst_136 = arith.constant 9.99999993E-9 : f32
    %344 = vector.broadcast %cst_136 : f32 to vector<16x1xf32>
    %345 = arith.addf %341, %344 : vector<16x1xf32>
    %346 = math.rsqrt %345 : vector<16x1xf32>
    %347 = vector.broadcast %346 : vector<16x1xf32> to vector<16x32xf32>
    %348 = arith.mulf %343, %347 : vector<16x32xf32>
    %349 = vector.broadcast %327 : vector<1x32xf32> to vector<16x32xf32>
    %350 = arith.mulf %348, %349 : vector<16x32xf32>
    %351 = vector.broadcast %328 : vector<1x32xf32> to vector<16x32xf32>
    %352 = arith.addf %350, %351 : vector<16x32xf32>
    %c12_137 = arith.constant 12 : index
    %c0_138 = arith.constant 0 : index
    %c0_139 = arith.constant 0 : index
    %353 = vector.load %arg3[%c12_137, %c0_138, %c0_139] : memref<13x32x32xbf16, #tpu.memory_space<vmem>>, vector<1x32x32xbf16>
    %354 = vector.shape_cast %353 : vector<1x32x32xbf16> to vector<32x32xbf16>
    %355 = arith.truncf %352 : vector<16x32xf32> to vector<16x32xbf16>
    %cst_140 = arith.constant dense<0.000000e+00> : vector<16x32xf32>
    %356 = tpu.matmul %355, %354, %cst_140 {dimension_numbers = #tpu.dot_dimension_numbers<[1], [0], [0], [1], [0, 0, 1, 1], [], []>} : vector<16x32xbf16>, vector<32x32xbf16>, vector<16x32xf32> -> vector<16x32xf32>
    %c22 = arith.constant 22 : index
    %c0_141 = arith.constant 0 : index
    %357 = vector.load %arg4[%c22, %c0_141] : memref<25x32xf32, #tpu.memory_space<vmem>>, vector<1x32xf32>
    %358 = vector.broadcast %357 : vector<1x32xf32> to vector<16x32xf32>
    %359 = arith.addf %356, %358 : vector<16x32xf32>
    %360 = arith.addf %359, %13 : vector<16x32xf32>
    %361 = arith.mulf %360, %11 : vector<16x32xf32>
    %cst_142 = arith.constant dense<0.000000e+00> : vector<16xf32>
    %362 = vector.multi_reduction <add>, %361, %cst_142 [1] : vector<16x32xf32> to vector<16xf32>
    %363 = vector.shape_cast %362 : vector<16xf32> to vector<16x1xf32>
    %364 = arith.mulf %360, %12 : vector<16x32xf32>
    %cst_143 = arith.constant dense<0.000000e+00> : vector<16xf32>
    %365 = vector.multi_reduction <add>, %364, %cst_143 [1] : vector<16x32xf32> to vector<16xf32>
    %366 = vector.shape_cast %365 : vector<16xf32> to vector<16x1xf32>
    %367 = tpu.concatenate %363, %366 in 1 : vector<16x1xf32>, vector<16x1xf32> -> vector<16x2xf32>
    %c0_144 = arith.constant 0 : index
    %c0_145 = arith.constant 0 : index
    %368 = vector.load %arg5[%c0_144, %c0_145] : memref<16x2xf32, #tpu.memory_space<vmem>>, vector<16x2xf32>
    tpu.vector_store %arg5[%c0_144, %c0_145], %367 {strides = array<i32>} : memref<16x2xf32, #tpu.memory_space<vmem>>, vector<16x2xf32>,
    return
  }
}

</mosaic_0001>

<llo_original>
// kernel: sasrec_forward.1
$region0: #{sasrec_forward.1}
  #allocation0 [shape = 'u32[]', space=smem, size = 0x4, offset = 0x4, fixed_abs, tag = 'smem constant byte address 0x4 - core index']
  #allocation1 [shape = 'u32[72,128]{1,0:T(1,128)}', space=vmem, size = 0x9000, scoped, tag = 'internal scratch']
  %s0 = inlined_call_operand.vmem [shape: s32[80,1], index: 0, kind: input, shape index: {}]
  %s1 = inlined_call_operand.vmem [shape: f32[16,16], index: 1, kind: input, shape index: {}]
  %s2 = inlined_call_operand.vmem [shape: bf16[64,32], index: 2, kind: input, shape index: {}]
  %s3 = inlined_call_operand.hbm [shape: bf16[13,32,32], index: 3, kind: input, shape index: {}]
  %s4 = inlined_call_operand.vmem [shape: f32[25,32], index: 4, kind: input, shape index: {}]
  %s5 = inlined_call_operand.vmem [shape: f32[16,2], index: 5, kind: output, shape index: {}]
  %s6 = sld [smem:[#allocation0]]
  $region34: #{sasrec_forward.1} parent=0
    _
  %s8 = ssub.s32 1, %s6
  %s9 = scalar_select 0, %s8, %s6
  $region1: #{sasrec_forward.1} parent=0
    #allocation2 [shape = 'u8[106496]{0}', space=vmem, size = 0x1a000, scoped, tag = 'input window, operand 3, single buffered']
    #allocation3 [shape = 's32[1]{0}', space=sflag, size = 0x4, scoped, tag = 'scoped memory for sasrec_forward.1']
    %10 = vsyncpa [#allocation3], 0
    // Predicated region
    $region2: #{sasrec_forward.1} parent=1 // pred_check
      _
    $region3: #{sasrec_forward.1} parent=1 // pred_check_branch
      %12 = sbr.rel (0) target = $region5
    $region4: #{sasrec_forward.1} parent=1 // pred_region
      _
    $region5: #{sasrec_forward.1} parent=1 // pred_fallthru
      _
    // Predicated region
    $region6: #{sasrec_forward.1} parent=1 // pred_check
      _
    $region7: #{sasrec_forward.1} parent=1 // pred_check_branch
      %14 = sbr.rel (0) target = $region9
    $region8: #{sasrec_forward.1} parent=1 // pred_region
      _
    $region9: #{sasrec_forward.1} parent=1 // pred_fallthru
      _
    // Predicated region
    $region10: #{sasrec_forward.1} parent=1 // pred_check
      _
    $region11: #{sasrec_forward.1} parent=1 // pred_check_branch
      %16 = sbr.rel (0) target = $region13
    $region12: #{sasrec_forward.1} parent=1 // pred_region
      _
    $region13: #{sasrec_forward.1} parent=1 // pred_fallthru
      _
    // Predicated region
    $region14: #{sasrec_forward.1} parent=1 // pred_check
      _
    $region15: #{sasrec_forward.1} parent=1 // pred_check_branch
      %18 = sbr.rel (0) target = $region17
    $region16: #{sasrec_forward.1} parent=1 // pred_region
      %20 = vsyncadd [#allocation3], 0
      %s21 = sshll.u32 %s3, 4
      %s22 = int_to_ptr.hbm [resolvable:$true] %s21
      %s23 = sshll.u32 [#allocation2], 4
      %s24 = int_to_ptr.vmem [resolvable:$true] %s23
      %29 = dma.hbm_to_vmem [thread:$0]  %s22, 3328, %s24, [#allocation3], 64, 64, 4
    $region17: #{sasrec_forward.1} parent=1 // pred_fallthru
      _
    // Predicated region
    $region18: #{sasrec_forward.1} parent=1 // pred_check
      _
    $region19: #{sasrec_forward.1} parent=1 // pred_check_branch
      %31 = sbr.rel (0) target = $region21
    $region20: #{sasrec_forward.1} parent=1 // pred_region
      _
    $region21: #{sasrec_forward.1} parent=1 // pred_fallthru
      _
    // Predicated region
    $region22: #{sasrec_forward.1} parent=1 // pred_check
      _
    $region23: #{sasrec_forward.1} parent=1 // pred_check_branch
      %33 = sbr.rel (0) target = $region25
    $region24: #{sasrec_forward.1} parent=1 // pred_region
      %35 = dma.done [#allocation3], 3328
    $region25: #{sasrec_forward.1} parent=1 // pred_fallthru
      _
    %v37 = vld [vmem:[%s0] sm:$0xff]
    %v38 = vld [vmem:[%s0 + $0x8] sm:$0xff]
    %v39 = vld [vmem:[%s0 + $0x10] sm:$0xff]
    %v40 = vld [vmem:[%s0 + $0x18] sm:$0xff]
    %v41 = vld [vmem:[%s0 + $0x20] sm:$0xff]
    %v42 = vld [vmem:[%s0 + $0x28] sm:$0xff]
    %v43 = vld [vmem:[%s0 + $0x30] sm:$0xff]
    %v44 = vld [vmem:[%s0 + $0x38] sm:$0xff]
    %v45 = vld [vmem:[%s0 + $0x40] sm:$0xff]
    %v46 = vld [vmem:[%s0 + $0x48] sm:$0xff]
    %v47 = vlaneseq
    %v48 = vand.u32 %v47, 127
    %49 = vset.pattern.permute.xlu0 0
    %50 = vperm.xlu0 %49, %v37
    %v51 = vpop.permute.xlu0 %50
    %52 = vset.pattern.permute.xlu0 0
    %53 = vperm.xlu0 %52, %v38
    %v54 = vpop.permute.xlu0 %53
    %55 = vset.pattern.permute.xlu0 0
    %56 = vperm.xlu0 %55, %v39
    %v57 = vpop.permute.xlu0 %56
    %58 = vset.pattern.permute.xlu0 0
    %59 = vperm.xlu0 %58, %v40
    %v60 = vpop.permute.xlu0 %59
    %61 = vset.pattern.permute.xlu0 0
    %62 = vperm.xlu0 %61, %v41
    %v63 = vpop.permute.xlu0 %62
    %64 = vset.pattern.permute.xlu0 0
    %65 = vperm.xlu0 %64, %v42
    %v66 = vpop.permute.xlu0 %65
    %67 = vset.pattern.permute.xlu0 0
    %68 = vperm.xlu0 %67, %v43
    %v69 = vpop.permute.xlu0 %68
    %70 = vset.pattern.permute.xlu0 0
    %71 = vperm.xlu0 %70, %v44
    %v72 = vpop.permute.xlu0 %71
    %73 = vset.pattern.permute.xlu0 0
    %74 = vperm.xlu0 %73, %v45
    %v75 = vpop.permute.xlu0 %74
    %76 = vset.pattern.permute.xlu0 0
    %77 = vperm.xlu0 %76, %v46
    %v78 = vpop.permute.xlu0 %77
    %vm79 = vcmp.eq.s32.totalorder %v48, %v51
    %vm80 = vcmp.eq.s32.totalorder %v48, %v54
    %vm81 = vcmp.eq.s32.totalorder %v48, %v57
    %vm82 = vcmp.eq.s32.totalorder %v48, %v60
    %vm83 = vcmp.eq.s32.totalorder %v48, %v63
    %vm84 = vcmp.eq.s32.totalorder %v48, %v66
    %vm85 = vcmp.eq.s32.totalorder %v48, %v69
    %vm86 = vcmp.eq.s32.totalorder %v48, %v72
    %vm87 = vcmp.eq.s32.totalorder %v48, %v75
    %vm88 = vcmp.eq.s32.totalorder %v48, %v78
    %v89 = vsel %vm79, 1, 0
    %v90 = vsel %vm80, 1, 0
    %v91 = vsel %vm81, 1, 0
    %v92 = vsel %vm82, 1, 0
    %v93 = vsel %vm83, 1, 0
    %v94 = vsel %vm84, 1, 0
    %v95 = vsel %vm85, 1, 0
    %v96 = vsel %vm86, 1, 0
    %v97 = vsel %vm87, 1, 0
    %v98 = vsel %vm88, 1, 0
    %v99 = vcvt.s32.f32 %v89
    %v100 = vcvt.s32.f32 %v90
    %v101 = vcvt.s32.f32 %v91
    %v102 = vcvt.s32.f32 %v92
    %v103 = vcvt.s32.f32 %v93
    %v104 = vcvt.s32.f32 %v94
    %v105 = vcvt.s32.f32 %v95
    %v106 = vcvt.s32.f32 %v96
    %v107 = vcvt.s32.f32 %v97
    %v108 = vcvt.s32.f32 %v98
    %v109 = vpack.c.bf16 %v100, %v99
    %v110 = vpack.c.bf16 %v102, %v101
    %v111 = vpack.c.bf16 %v104, %v103
    %v112 = vpack.c.bf16 %v106, %v105
    %v113 = vpack.c.bf16 %v108, %v107
    %v114 = vld [vmem:[%s2] sm:$0xf]
    %v115 = vld [vmem:[%s2 + $0x4] sm:$0xf]
    %v116 = vld [vmem:[%s2 + $0x8] sm:$0xf]
    %v117 = vld [vmem:[%s2 + $0xc] sm:$0xf]
    %v118 = vld [vmem:[%s2 + $0x10] sm:$0xf]
    %v119 = vld [vmem:[%s2 + $0x14] sm:$0xf]
    %v120 = vld [vmem:[%s2 + $0x18] sm:$0xf]
    %v121 = vld [vmem:[%s2 + $0x1c] sm:$0xf]
    %v130 = vunpack.c.l.b16 %v114
    %v131 = vunpack.c.l.b16 %v115
    %v132 = vunpack.c.l.b16 %v116
    %v133 = vunpack.c.l.b16 %v117
    %v134 = vunpack.c.l.b16 %v118
    %v135 = vunpack.c.l.b16 %v119
    %v136 = vunpack.c.l.b16 %v120
    %v137 = vunpack.c.l.b16 %v121
    %v138 = vpack.c.b16 %v131, %v130
    %v139 = vpack.c.b16 %v133, %v132
    %v140 = vpack.c.b16 %v135, %v134
    %v141 = vpack.c.b16 %v137, %v136
    %vm146 = vcmask 523264
    %v148 = vsel %vm146, %v109, 0
    %v151 = vsel %vm146, %v110, 0
    %v154 = vsel %vm146, %v111, 0
    %v157 = vsel %vm146, %v112, 0
    %v160 = vsel %vm146, %v113, 0
    %162 = vmatpush.bf16.msra.mxu0 0
    %163 = vmatpush.bf16.msra.mxu0 0
    %164 = vmatpush.bf16.msra.mxu0 0
    %165 = vmatpush.bf16.msra.mxu0 0
    %166 = vmatpush.bf16.msra.mxu0 %v141
    %167 = vmatpush.bf16.msra.mxu0 %v140
    %168 = vmatpush.bf16.msra.mxu0 %v139
    %169 = vmatpush.bf16.msra.mxu0 %v138
    %170 = vmatmul.bf16.gmra.mxu0 %v148
    %v171 = vpop.f32.mrf.mxu0
    %v172 = vadd.f32 0.0, %v171
    %v173 = vpop.f32.mrf.mxu0
    %v174 = vadd.f32 0.0, %v173
    %175 = vmatmul.bf16.gmra.mxu0 %v151
    %v176 = vpop.f32.mrf.mxu0
    %v177 = vadd.f32 0.0, %v176
    %v178 = vpop.f32.mrf.mxu0
    %v179 = vadd.f32 0.0, %v178
    %180 = vmatmul.bf16.gmra.mxu0 %v154
    %v181 = vpop.f32.mrf.mxu0
    %v182 = vadd.f32 0.0, %v181
    %v183 = vpop.f32.mrf.mxu0
    %v184 = vadd.f32 0.0, %v183
    %185 = vmatmul.bf16.gmra.mxu0 %v157
    %v186 = vpop.f32.mrf.mxu0
    %v187 = vadd.f32 0.0, %v186
    %v188 = vpop.f32.mrf.mxu0
    %v189 = vadd.f32 0.0, %v188
    %190 = vmatmul.bf16.gmra.mxu0 %v160
    %v191 = vpop.f32.mrf.mxu0
    %v192 = vadd.f32 0.0, %v191
    %v193 = vpop.f32.mrf.mxu0
    %v194 = vadd.f32 0.0, %v193
    %195 = vdwg.mxu0
    %vm196 = vcmp.ne.s32.totalorder %v37, 0
    %vm197 = vcmp.ne.s32.totalorder %v38, 0
    %v198 = vsel %vm196, 1, 0
    %v199 = vsel %vm197, 1, 0
    %v200 = vcvt.s32.f32 %v198
    %v201 = vcvt.s32.f32 %v199
    %v202 = vmul.f32 %v172, 5.656854
    %v203 = vmul.f32 %v174, 5.656854
    %v204 = vadd.f32 %v202, %v177
    %v205 = vadd.f32 %v203, %v179
    %207 = vset.pattern.permute.xlu0 0
    %208 = vperm.xlu0 %207, %v200
    %v209 = vpop.permute.xlu0 %208
    %212 = vset.pattern.permute.xlu0 0
    %213 = vperm.xlu0 %212, %v201
    %v214 = vpop.permute.xlu0 %213
    %v216 = vmul.f32 %v204, %v209
    %v217 = vmul.f32 %v205, %v214
    %v218 = vld [vmem:[%s1] sm:$0xff]
    %v219 = vld [vmem:[%s1 + $0x8] sm:$0xff]
    %v220 = vld [vmem:[%s4] sm:$0x1]
    %v221 = vld [vmem:[%s4 + $0x1] sm:$0x1]
    %vm222 = vcmask 261120
    %v223 = vsel %vm222, %v216, 0.0
    %224 = vadd.xlane.f32.xlu0 %v223
    %v225 = vpop.xlane.xlu0 %224
    %v226 = vsel %vm222, %v217, 0.0
    %227 = vadd.xlane.f32.xlu0 %v226
    %v228 = vpop.xlane.xlu0 %227
    %v229 = vrcp.pop 32.0
    %v230 = vmul.f32 32.0, %v229
    %v231 = vsub.f32 1.0, %v230
    %v232 = vmul.f32 %v229, %v231
    %v233 = vadd.f32 %v229, %v232
    %vm234 = vweird.f32 %v229
    %v235 = vsel %vm234, %v229, %v233
    %v236 = vmul.f32 %v225, %v235
    %v237 = vmul.f32 %v228, %v235
    %v238 = vmul.f32 %v216, %v216
    %v239 = vmul.f32 %v217, %v217
    %v240 = vsel %vm222, %v238, 0.0
    %241 = vadd.xlane.f32.xlu0 %v240
    %v242 = vpop.xlane.xlu0 %241
    %v243 = vsel %vm222, %v239, 0.0
    %244 = vadd.xlane.f32.xlu0 %v243
    %v245 = vpop.xlane.xlu0 %244
    %v246 = vmul.f32 %v242, %v235
    %v247 = vmul.f32 %v245, %v235
    %v248 = vmul.f32 %v236, %v236
    %v249 = vmul.f32 %v237, %v237
    %v250 = vsub.f32 %v246, %v248
    %v251 = vsub.f32 %v247, %v249
    %v252 = vmax.f32 %v250, 0.0
    %v253 = vmax.f32 %v251, 0.0
    %v254 = vsub.f32 %v216, %v236
    %v255 = vsub.f32 %v217, %v237
    %v256 = vadd.f32 %v252, 1e-08
    %v257 = vadd.f32 %v253, 1e-08
    %v258 = vrsqrt.pop %v256
    %v259 = vmul.f32 %v258, %v256
    %v260 = vmul.f32 %v259, %v258
    %v261 = vmul.f32 0.5, %v260
    %v262 = vsub.f32 1.5, %v261
    %v263 = vmul.f32 %v258, %v262
    %vm264 = vweird.f32 %v256
    %vm265 = vweird.f32 %v258
    %vm266 = vmor %vm264, %vm265
    %v267 = vsel %vm266, %v258, %v263
    %v268 = vrsqrt.pop %v257
    %v269 = vmul.f32 %v268, %v257
    %v270 = vmul.f32 %v269, %v268
    %v271 = vmul.f32 0.5, %v270
    %v272 = vsub.f32 1.5, %v271
    %v273 = vmul.f32 %v268, %v272
    %vm274 = vweird.f32 %v257
    %vm275 = vweird.f32 %v268
    %vm276 = vmor %vm274, %vm275
    %v277 = vsel %vm276, %v268, %v273
    %v278 = vmul.f32 %v254, %v267
    %v279 = vmul.f32 %v255, %v277
    %v280 = vperm.slane %v220, 0
    %v281 = vmul.f32 %v278, %v280
    %v282 = vmul.f32 %v279, %v280
    %v283 = vperm.slane %v221, 0
    %v284 = vadd.f32 %v281, %v283
    %v285 = vadd.f32 %v282, %v283
    %v286 = vld [vmem:[#allocation2] sm:$0xf]
    %v287 = vld [vmem:[#allocation2 + $0x4] sm:$0xf]
    %v288 = vld [vmem:[#allocation2 + $0x8] sm:$0xf]
    %v289 = vld [vmem:[#allocation2 + $0xc] sm:$0xf]
    %v290 = vpack.c.bf16 %v285, %v284
    %v291 = vld [vmem:[%s4 + $0x2] sm:$0x1]
    %v292 = vperm.slane %v291, 0
    %v297 = vunpack.c.l.b16 %v286
    %v298 = vunpack.c.l.b16 %v287
    %v299 = vunpack.c.l.b16 %v288
    %v300 = vunpack.c.l.b16 %v289
    %v301 = vpack.c.b16 %v298, %v297
    %v302 = vpack.c.b16 %v300, %v299
    %v306 = vsel %vm222, %v290, 0
    %308 = vmatpush.bf16.msra.mxu0 0
    %309 = vmatpush.bf16.msra.mxu0 0
    %310 = vmatpush.bf16.msra.mxu0 0
    %311 = vmatpush.bf16.msra.mxu0 0
    %312 = vmatpush.bf16.msra.mxu0 0
    %313 = vmatpush.bf16.msra.mxu0 0
    %314 = vmatpush.bf16.msra.mxu0 %v302
    %315 = vmatpush.bf16.msra.mxu0 %v301
    %316 = vmatmul.bf16.gmra.mxu0 %v306
    %v317 = vpop.f32.mrf.mxu0
    %v318 = vadd.f32 %v292, %v317
    %v319 = vpop.f32.mrf.mxu0
    %v320 = vadd.f32 %v292, %v319
    %321 = vdwg.mxu0
    %s322 = scalar_lea.vmem [#allocation2], 16
    %v323 = vld [vmem:[%s322] sm:$0xf]
    %v324 = vld [vmem:[%s322 + $0x4] sm:$0xf]
    %v325 = vld [vmem:[%s322 + $0x8] sm:$0xf]
    %v326 = vld [vmem:[%s322 + $0xc] sm:$0xf]
    %v327 = vpack.c.bf16 %v217, %v216
    %v328 = vld [vmem:[%s4 + $0x3] sm:$0x1]
    %v329 = vperm.slane %v328, 0
    %v334 = vunpack.c.l.b16 %v323
    %v335 = vunpack.c.l.b16 %v324
    %v336 = vunpack.c.l.b16 %v325
    %v337 = vunpack.c.l.b16 %v326
    %v338 = vpack.c.b16 %v335, %v334
    %v339 = vpack.c.b16 %v337, %v336
    %v343 = vsel %vm222, %v327, 0
    %345 = vmatpush.bf16.msra.mxu0 0
    %346 = vmatpush.bf16.msra.mxu0 0
    %347 = vmatpush.bf16.msra.mxu0 0
    %348 = vmatpush.bf16.msra.mxu0 0
    %349 = vmatpush.bf16.msra.mxu0 0
    %350 = vmatpush.bf16.msra.mxu0 0
    %351 = vmatpush.bf16.msra.mxu0 %v339
    %352 = vmatpush.bf16.msra.mxu0 %v338
    %353 = vmatmul.bf16.gmra.mxu0 %v343
    %v354 = vpop.f32.mrf.mxu0
    %v355 = vadd.f32 %v329, %v354
    %v356 = vpop.f32.mrf.mxu0
    %v357 = vadd.f32 %v329, %v356
    %358 = vdwg.mxu0
    %s359 = scalar_lea.vmem [#allocation2], 32
    %v360 = vld [vmem:[%s359] sm:$0xf]
    %v361 = vld [vmem:[%s359 + $0x4] sm:$0xf]
    %v362 = vld [vmem:[%s359 + $0x8] sm:$0xf]
    %v363 = vld [vmem:[%s359 + $0xc] sm:$0xf]
    %v364 = vld [vmem:[%s4 + $0x4] sm:$0x1]
    %v365 = vperm.slane %v364, 0
    %v370 = vunpack.c.l.b16 %v360
    %v371 = vunpack.c.l.b16 %v361
    %v372 = vunpack.c.l.b16 %v362
    %v373 = vunpack.c.l.b16 %v363
    %v374 = vpack.c.b16 %v371, %v370
    %v375 = vpack.c.b16 %v373, %v372
    %378 = vmatpush.bf16.msra.mxu0 0
    %379 = vmatpush.bf16.msra.mxu0 0
    %380 = vmatpush.bf16.msra.mxu0 0
    %381 = vmatpush.bf16.msra.mxu0 0
    %382 = vmatpush.bf16.msra.mxu0 0
    %383 = vmatpush.bf16.msra.mxu0 0
    %384 = vmatpush.bf16.msra.mxu0 %v375
    %385 = vmatpush.bf16.msra.mxu0 %v374
    %386 = vmatmul.bf16.gmra.mxu0 %v343
    %v387 = vpop.f32.mrf.mxu0
    %v388 = vadd.f32 %v365, %v387
    %v389 = vpop.f32.mrf.mxu0
    %v390 = vadd.f32 %v365, %v389
    %391 = vdwg.mxu0
    %v392 = vpack.c.bf16 %v357, %v355
    %v393 = vpack.c.bf16 %v390, %v388
    %v394 = vld [vmem:[%s4 + $0x17] sm:$0x1]
    %v395 = vperm.slane %v394, 0
    %v396 = vmul.f32 %v318, %v395
    %v397 = vmul.f32 %v320, %v395
    %v398 = vpack.c.bf16 %v397, %v396
    %v400 = vsel %vm222, %v398, 0
    %v403 = vsel %vm222, %v392, 0
    %405 = vmatpush.bf16.xpose.msra.mxu0 0
    %406 = vmatpush.bf16.xpose.msra.mxu0 0
    %407 = vmatpush.bf16.xpose.msra.mxu0 0
    %408 = vmatpush.bf16.xpose.msra.mxu0 0
    %409 = vmatpush.bf16.xpose.msra.mxu0 0
    %410 = vmatpush.bf16.xpose.msra.mxu0 0
    %411 = vmatpush.bf16.xpose.msra.mxu0 0
    %412 = vmatpush.bf16.xpose.msra.mxu0 %v403
    %413 = vmatmul.bf16.gmra.mxu0 %v400
    %v414 = vpop.f32.mrf.mxu0
    %v415 = vadd.f32 0.0, %v414
    %v416 = vpop.f32.mrf.mxu0
    %v417 = vadd.f32 0.0, %v416
    %418 = vdwg.mxu0
    %v419 = vmul.f32 %v415, 0.25
    %v420 = vmul.f32 %v417, 0.25
    %v421 = vadd.f32 %v419, %v218
    %v422 = vadd.f32 %v420, %v219
    %vm423 = vcmask 130048
    %v424 = vsel %vm423, %v421, -inf
    %425 = vmax.xlane.f32.xlu0 %v424
    %v426 = vpop.xlane.xlu0 %425
    %v427 = vsel %vm423, %v422, -inf
    %428 = vmax.xlane.f32.xlu0 %v427
    %v429 = vpop.xlane.xlu0 %428
    %v430 = vsub.f32 %v421, %v426
    %v431 = vsub.f32 %v422, %v429
    %v432 = vmul.f32 %v430, 1.442695
    %v433 = vpow.pop %v432
    %v434 = vmul.f32 %v431, 1.442695
    %v435 = vpow.pop %v434
    %v436 = vsel %vm423, %v433, 0.0
    %437 = vadd.xlane.f32.xlu0 %v436
    %v438 = vpop.xlane.xlu0 %437
    %v439 = vsel %vm423, %v435, 0.0
    %440 = vadd.xlane.f32.xlu0 %v439
    %v441 = vpop.xlane.xlu0 %440
    %v442 = vrcp.pop %v438
    %v443 = vmul.f32 %v438, %v442
    %v444 = vsub.f32 1.0, %v443
    %v445 = vmul.f32 %v442, %v444
    %v446 = vadd.f32 %v442, %v445
    %vm447 = vweird.f32 %v438
    %vm448 = vweird.f32 %v442
    %vm449 = vmor %vm447, %vm448
    %v450 = vsel %vm449, %v442, %v446
    %v451 = vand.u32 2147483647, %v438
    %vm452 = vcmp.eq.f32.partialorder %v451, 8.507059e+37
    %v453 = vand.u32 %v438, 2147483648
    %v454 = vor.u32 1.1754944e-38, %v453
    %v455 = vsel %vm452, %v454, %v450
    %v456 = vrcp.pop %v441
    %v457 = vmul.f32 %v441, %v456
    %v458 = vsub.f32 1.0, %v457
    %v459 = vmul.f32 %v456, %v458
    %v460 = vadd.f32 %v456, %v459
    %vm461 = vweird.f32 %v441
    %vm462 = vweird.f32 %v456
    %vm463 = vmor %vm461, %vm462
    %v464 = vsel %vm463, %v456, %v460
    %v465 = vand.u32 2147483647, %v441
    %vm466 = vcmp.eq.f32.partialorder %v465, 8.507059e+37
    %v467 = vand.u32 %v441, 2147483648
    %v468 = vor.u32 1.1754944e-38, %v467
    %v469 = vsel %vm466, %v468, %v464
    %v470 = vmul.f32 %v433, %v455
    %v471 = vmul.f32 %v435, %v469
    %v472 = vpack.c.bf16 %v471, %v470
    %v474 = vsel %vm423, %v472, 0
    %476 = vmatpush.bf16.msra.mxu0 0
    %477 = vmatpush.bf16.msra.mxu0 0
    %478 = vmatpush.bf16.msra.mxu0 0
    %479 = vmatpush.bf16.msra.mxu0 0
    %480 = vmatpush.bf16.msra.mxu0 0
    %481 = vmatpush.bf16.msra.mxu0 0
    %482 = vmatpush.bf16.msra.mxu0 0
    %483 = vmatpush.bf16.msra.mxu0 %v393
    %484 = vmatmul.bf16.gmra.mxu0 %v474
    %v485 = vpop.f32.mrf.mxu0
    %v486 = vadd.f32 0.0, %v485
    %v487 = vpop.f32.mrf.mxu0
    %v488 = vadd.f32 0.0, %v487
    %489 = vdwg.mxu0
    %v490 = vmul.f32 %v486, %v395
    %v491 = vmul.f32 %v488, %v395
    %v492 = vadd.f32 %v490, 0.0
    %v493 = vadd.f32 %v491, 0.0
    %v494 = vld [vmem:[%s4 + $0x18] sm:$0x1]
    %v495 = vperm.slane %v494, 0
    %v496 = vmul.f32 %v318, %v495
    %v497 = vmul.f32 %v320, %v495
    %v498 = vpack.c.bf16 %v497, %v496
    %v500 = vsel %vm222, %v498, 0
    %502 = vmatpush.bf16.xpose.msra.mxu0 0
    %503 = vmatpush.bf16.xpose.msra.mxu0 0
    %504 = vmatpush.bf16.xpose.msra.mxu0 0
    %505 = vmatpush.bf16.xpose.msra.mxu0 0
    %506 = vmatpush.bf16.xpose.msra.mxu0 0
    %507 = vmatpush.bf16.xpose.msra.mxu0 0
    %508 = vmatpush.bf16.xpose.msra.mxu0 0
    %509 = vmatpush.bf16.xpose.msra.mxu0 %v403
    %510 = vmatmul.bf16.gmra.mxu0 %v500
    %v511 = vpop.f32.mrf.mxu0
    %v512 = vadd.f32 0.0, %v511
    %v513 = vpop.f32.mrf.mxu0
    %v514 = vadd.f32 0.0, %v513
    %515 = vdwg.mxu0
    %v516 = vmul.f32 %v512, 0.25
    %v517 = vmul.f32 %v514, 0.25
    %v518 = vadd.f32 %v516, %v218
    %v519 = vadd.f32 %v517, %v219
    %v520 = vsel %vm423, %v518, -inf
    %521 = vmax.xlane.f32.xlu0 %v520
    %v522 = vpop.xlane.xlu0 %521
    %v523 = vsel %vm423, %v519, -inf
    %524 = vmax.xlane.f32.xlu0 %v523
    %v525 = vpop.xlane.xlu0 %524
    %v526 = vsub.f32 %v518, %v522
    %v527 = vsub.f32 %v519, %v525
    %v528 = vmul.f32 %v526, 1.442695
    %v529 = vpow.pop %v528
    %v530 = vmul.f32 %v527, 1.442695
    %v531 = vpow.pop %v530
    %v532 = vsel %vm423, %v529, 0.0
    %533 = vadd.xlane.f32.xlu0 %v532
    %v534 = vpop.xlane.xlu0 %533
    %v535 = vsel %vm423, %v531, 0.0
    %536 = vadd.xlane.f32.xlu0 %v535
    %v537 = vpop.xlane.xlu0 %536
    %v538 = vrcp.pop %v534
    %v539 = vmul.f32 %v534, %v538
    %v540 = vsub.f32 1.0, %v539
    %v541 = vmul.f32 %v538, %v540
    %v542 = vadd.f32 %v538, %v541
    %vm543 = vweird.f32 %v534
    %vm544 = vweird.f32 %v538
    %vm545 = vmor %vm543, %vm544
    %v546 = vsel %vm545, %v538, %v542
    %v547 = vand.u32 2147483647, %v534
    %vm548 = vcmp.eq.f32.partialorder %v547, 8.507059e+37
    %v549 = vand.u32 %v534, 2147483648
    %v550 = vor.u32 1.1754944e-38, %v549
    %v551 = vsel %vm548, %v550, %v546
    %v552 = vrcp.pop %v537
    %v553 = vmul.f32 %v537, %v552
    %v554 = vsub.f32 1.0, %v553
    %v555 = vmul.f32 %v552, %v554
    %v556 = vadd.f32 %v552, %v555
    %vm557 = vweird.f32 %v537
    %vm558 = vweird.f32 %v552
    %vm559 = vmor %vm557, %vm558
    %v560 = vsel %vm559, %v552, %v556
    %v561 = vand.u32 2147483647, %v537
    %vm562 = vcmp.eq.f32.partialorder %v561, 8.507059e+37
    %v563 = vand.u32 %v537, 2147483648
    %v564 = vor.u32 1.1754944e-38, %v563
    %v565 = vsel %vm562, %v564, %v560
    %v566 = vmul.f32 %v529, %v551
    %v567 = vmul.f32 %v531, %v565
    %v568 = vpack.c.bf16 %v567, %v566
    %v570 = vsel %vm423, %v568, 0
    %572 = vmatpush.bf16.msra.mxu0 0
    %573 = vmatpush.bf16.msra.mxu0 0
    %574 = vmatpush.bf16.msra.mxu0 0
    %575 = vmatpush.bf16.msra.mxu0 0
    %576 = vmatpush.bf16.msra.mxu0 0
    %577 = vmatpush.bf16.msra.mxu0 0
    %578 = vmatpush.bf16.msra.mxu0 0
    %579 = vmatpush.bf16.msra.mxu0 %v393
    %580 = vmatmul.bf16.gmra.mxu0 %v570
    %v581 = vpop.f32.mrf.mxu0
    %v582 = vadd.f32 0.0, %v581
    %v583 = vpop.f32.mrf.mxu0
    %v584 = vadd.f32 0.0, %v583
    %585 = vdwg.mxu0
    %v586 = vmul.f32 %v582, %v495
    %v587 = vmul.f32 %v584, %v495
    %v588 = vadd.f32 %v492, %v586
    %v589 = vadd.f32 %v493, %v587
    %s590 = scalar_lea.vmem [#allocation2], 48
    %v591 = vld [vmem:[%s590] sm:$0xf]
    %v592 = vld [vmem:[%s590 + $0x4] sm:$0xf]
    %v593 = vld [vmem:[%s590 + $0x8] sm:$0xf]
    %v594 = vld [vmem:[%s590 + $0xc] sm:$0xf]
    %v595 = vpack.c.bf16 %v589, %v588
    %v596 = vld [vmem:[%s4 + $0x5] sm:$0x1]
    %v597 = vperm.slane %v596, 0
    %v602 = vunpack.c.l.b16 %v591
    %v603 = vunpack.c.l.b16 %v592
    %v604 = vunpack.c.l.b16 %v593
    %v605 = vunpack.c.l.b16 %v594
    %v606 = vpack.c.b16 %v603, %v602
    %v607 = vpack.c.b16 %v605, %v604
    %v611 = vsel %vm222, %v595, 0
    %613 = vmatpush.bf16.msra.mxu0 0
    %614 = vmatpush.bf16.msra.mxu0 0
    %615 = vmatpush.bf16.msra.mxu0 0
    %616 = vmatpush.bf16.msra.mxu0 0
    %617 = vmatpush.bf16.msra.mxu0 0
    %618 = vmatpush.bf16.msra.mxu0 0
    %619 = vmatpush.bf16.msra.mxu0 %v607
    %620 = vmatpush.bf16.msra.mxu0 %v606
    %621 = vmatmul.bf16.gmra.mxu0 %v611
    %v622 = vpop.f32.mrf.mxu0
    %v623 = vadd.f32 %v597, %v622
    %v624 = vpop.f32.mrf.mxu0
    %v625 = vadd.f32 %v597, %v624
    %626 = vdwg.mxu0
    %v627 = vadd.f32 %v284, %v623
    %v628 = vadd.f32 %v285, %v625
    %v629 = vld [vmem:[%s4 + $0x6] sm:$0x1]
    %v630 = vld [vmem:[%s4 + $0x7] sm:$0x1]
    %v631 = vsel %vm222, %v627, 0.0
    %632 = vadd.xlane.f32.xlu0 %v631
    %v633 = vpop.xlane.xlu0 %632
    %v634 = vsel %vm222, %v628, 0.0
    %635 = vadd.xlane.f32.xlu0 %v634
    %v636 = vpop.xlane.xlu0 %635
    %v637 = vmul.f32 %v633, %v235
    %v638 = vmul.f32 %v636, %v235
    %v639 = vmul.f32 %v627, %v627
    %v640 = vmul.f32 %v628, %v628
    %v641 = vsel %vm222, %v639, 0.0
    %642 = vadd.xlane.f32.xlu0 %v641
    %v643 = vpop.xlane.xlu0 %642
    %v644 = vsel %vm222, %v640, 0.0
    %645 = vadd.xlane.f32.xlu0 %v644
    %v646 = vpop.xlane.xlu0 %645
    %v647 = vmul.f32 %v643, %v235
    %v648 = vmul.f32 %v646, %v235
    %v649 = vmul.f32 %v637, %v637
    %v650 = vmul.f32 %v638, %v638
    %v651 = vsub.f32 %v647, %v649
    %v652 = vsub.f32 %v648, %v650
    %v653 = vmax.f32 %v651, 0.0
    %v654 = vmax.f32 %v652, 0.0
    %v655 = vsub.f32 %v627, %v637
    %v656 = vsub.f32 %v628, %v638
    %v657 = vadd.f32 %v653, 1e-08
    %v658 = vadd.f32 %v654, 1e-08
    %v659 = vrsqrt.pop %v657
    %v660 = vmul.f32 %v659, %v657
    %v661 = vmul.f32 %v660, %v659
    %v662 = vmul.f32 0.5, %v661
    %v663 = vsub.f32 1.5, %v662
    %v664 = vmul.f32 %v659, %v663
    %vm665 = vweird.f32 %v657
    %vm666 = vweird.f32 %v659
    %vm667 = vmor %vm665, %vm666
    %v668 = vsel %vm667, %v659, %v664
    %v669 = vrsqrt.pop %v658
    %v670 = vmul.f32 %v669, %v658
    %v671 = vmul.f32 %v670, %v669
    %v672 = vmul.f32 0.5, %v671
    %v673 = vsub.f32 1.5, %v672
    %v674 = vmul.f32 %v669, %v673
    %vm675 = vweird.f32 %v658
    %vm676 = vweird.f32 %v669
    %vm677 = vmor %vm675, %vm676
    %v678 = vsel %vm677, %v669, %v674
    %v679 = vmul.f32 %v655, %v668
    %v680 = vmul.f32 %v656, %v678
    %v681 = vperm.slane %v629, 0
    %v682 = vmul.f32 %v679, %v681
    %v683 = vmul.f32 %v680, %v681
    %v684 = vperm.slane %v630, 0
    %v685 = vadd.f32 %v682, %v684
    %v686 = vadd.f32 %v683, %v684
    %s687 = scalar_lea.vmem [#allocation2], 64
    %v688 = vld [vmem:[%s687] sm:$0xf]
    %v689 = vld [vmem:[%s687 + $0x4] sm:$0xf]
    %v690 = vld [vmem:[%s687 + $0x8] sm:$0xf]
    %v691 = vld [vmem:[%s687 + $0xc] sm:$0xf]
    %v692 = vpack.c.bf16 %v686, %v685
    %v693 = vld [vmem:[%s4 + $0x8] sm:$0x1]
    %v694 = vperm.slane %v693, 0
    %v699 = vunpack.c.l.b16 %v688
    %v700 = vunpack.c.l.b16 %v689
    %v701 = vunpack.c.l.b16 %v690
    %v702 = vunpack.c.l.b16 %v691
    %v703 = vpack.c.b16 %v700, %v699
    %v704 = vpack.c.b16 %v702, %v701
    %v708 = vsel %vm222, %v692, 0
    %710 = vmatpush.bf16.msra.mxu0 0
    %711 = vmatpush.bf16.msra.mxu0 0
    %712 = vmatpush.bf16.msra.mxu0 0
    %713 = vmatpush.bf16.msra.mxu0 0
    %714 = vmatpush.bf16.msra.mxu0 0
    %715 = vmatpush.bf16.msra.mxu0 0
    %716 = vmatpush.bf16.msra.mxu0 %v704
    %717 = vmatpush.bf16.msra.mxu0 %v703
    %718 = vmatmul.bf16.gmra.mxu0 %v708
    %v719 = vpop.f32.mrf.mxu0
    %v720 = vadd.f32 %v694, %v719
    %v721 = vpop.f32.mrf.mxu0
    %v722 = vadd.f32 %v694, %v721
    %723 = vdwg.mxu0
    %v724 = vmax.f32 %v720, 0.0
    %v725 = vmax.f32 %v722, 0.0
    %s726 = scalar_lea.vmem [#allocation2], 80
    %v727 = vld [vmem:[%s726] sm:$0xf]
    %v728 = vld [vmem:[%s726 + $0x4] sm:$0xf]
    %v729 = vld [vmem:[%s726 + $0x8] sm:$0xf]
    %v730 = vld [vmem:[%s726 + $0xc] sm:$0xf]
    %v731 = vpack.c.bf16 %v725, %v724
    %v732 = vld [vmem:[%s4 + $0x9] sm:$0x1]
    %v733 = vperm.slane %v732, 0
    %v738 = vunpack.c.l.b16 %v727
    %v739 = vunpack.c.l.b16 %v728
    %v740 = vunpack.c.l.b16 %v729
    %v741 = vunpack.c.l.b16 %v730
    %v742 = vpack.c.b16 %v739, %v738
    %v743 = vpack.c.b16 %v741, %v740
    %v747 = vsel %vm222, %v731, 0
    %749 = vmatpush.bf16.msra.mxu0 0
    %750 = vmatpush.bf16.msra.mxu0 0
    %751 = vmatpush.bf16.msra.mxu0 0
    %752 = vmatpush.bf16.msra.mxu0 0
    %753 = vmatpush.bf16.msra.mxu0 0
    %754 = vmatpush.bf16.msra.mxu0 0
    %755 = vmatpush.bf16.msra.mxu0 %v743
    %756 = vmatpush.bf16.msra.mxu0 %v742
    %757 = vmatmul.bf16.gmra.mxu0 %v747
    %v758 = vpop.f32.mrf.mxu0
    %v759 = vadd.f32 %v733, %v758
    %v760 = vpop.f32.mrf.mxu0
    %v761 = vadd.f32 %v733, %v760
    %762 = vdwg.mxu0
    %v763 = vadd.f32 %v685, %v759
    %v764 = vadd.f32 %v686, %v761
    %v765 = vmul.f32 %v763, %v209
    %v766 = vmul.f32 %v764, %v214
    %v767 = vld [vmem:[%s4 + $0xa] sm:$0x1]
    %v768 = vld [vmem:[%s4 + $0xb] sm:$0x1]
    %v769 = vsel %vm222, %v765, 0.0
    %770 = vadd.xlane.f32.xlu0 %v769
    %v771 = vpop.xlane.xlu0 %770
    %v772 = vsel %vm222, %v766, 0.0
    %773 = vadd.xlane.f32.xlu0 %v772
    %v774 = vpop.xlane.xlu0 %773
    %v775 = vmul.f32 %v771, %v235
    %v776 = vmul.f32 %v774, %v235
    %v777 = vmul.f32 %v765, %v765
    %v778 = vmul.f32 %v766, %v766
    %v779 = vsel %vm222, %v777, 0.0
    %780 = vadd.xlane.f32.xlu0 %v779
    %v781 = vpop.xlane.xlu0 %780
    %v782 = vsel %vm222, %v778, 0.0
    %783 = vadd.xlane.f32.xlu0 %v782
    %v784 = vpop.xlane.xlu0 %783
    %v785 = vmul.f32 %v781, %v235
    %v786 = vmul.f32 %v784, %v235
    %v787 = vmul.f32 %v775, %v775
    %v788 = vmul.f32 %v776, %v776
    %v789 = vsub.f32 %v785, %v787
    %v790 = vsub.f32 %v786, %v788
    %v791 = vmax.f32 %v789, 0.0
    %v792 = vmax.f32 %v790, 0.0
    %v793 = vsub.f32 %v765, %v775
    %v794 = vsub.f32 %v766, %v776
    %v795 = vadd.f32 %v791, 1e-08
    %v796 = vadd.f32 %v792, 1e-08
    %v797 = vrsqrt.pop %v795
    %v798 = vmul.f32 %v797, %v795
    %v799 = vmul.f32 %v798, %v797
    %v800 = vmul.f32 0.5, %v799
    %v801 = vsub.f32 1.5, %v800
    %v802 = vmul.f32 %v797, %v801
    %vm803 = vweird.f32 %v795
    %vm804 = vweird.f32 %v797
    %vm805 = vmor %vm803, %vm804
    %v806 = vsel %vm805, %v797, %v802
    %v807 = vrsqrt.pop %v796
    %v808 = vmul.f32 %v807, %v796
    %v809 = vmul.f32 %v808, %v807
    %v810 = vmul.f32 0.5, %v809
    %v811 = vsub.f32 1.5, %v810
    %v812 = vmul.f32 %v807, %v811
    %vm813 = vweird.f32 %v796
    %vm814 = vweird.f32 %v807
    %vm815 = vmor %vm813, %vm814
    %v816 = vsel %vm815, %v807, %v812
    %v817 = vmul.f32 %v793, %v806
    %v818 = vmul.f32 %v794, %v816
    %v819 = vperm.slane %v767, 0
    %v820 = vmul.f32 %v817, %v819
    %v821 = vmul.f32 %v818, %v819
    %v822 = vperm.slane %v768, 0
    %v823 = vadd.f32 %v820, %v822
    %v824 = vadd.f32 %v821, %v822
    %s825 = scalar_lea.vmem [#allocation2], 96
    %v826 = vld [vmem:[%s825] sm:$0xf]
    %v827 = vld [vmem:[%s825 + $0x4] sm:$0xf]
    %v828 = vld [vmem:[%s825 + $0x8] sm:$0xf]
    %v829 = vld [vmem:[%s825 + $0xc] sm:$0xf]
    %v830 = vpack.c.bf16 %v824, %v823
    %v831 = vld [vmem:[%s4 + $0xc] sm:$0x1]
    %v832 = vperm.slane %v831, 0
    %v837 = vunpack.c.l.b16 %v826
    %v838 = vunpack.c.l.b16 %v827
    %v839 = vunpack.c.l.b16 %v828
    %v840 = vunpack.c.l.b16 %v829
    %v841 = vpack.c.b16 %v838, %v837
    %v842 = vpack.c.b16 %v840, %v839
    %v846 = vsel %vm222, %v830, 0
    %848 = vmatpush.bf16.msra.mxu0 0
    %849 = vmatpush.bf16.msra.mxu0 0
    %850 = vmatpush.bf16.msra.mxu0 0
    %851 = vmatpush.bf16.msra.mxu0 0
    %852 = vmatpush.bf16.msra.mxu0 0
    %853 = vmatpush.bf16.msra.mxu0 0
    %854 = vmatpush.bf16.msra.mxu0 %v842
    %855 = vmatpush.bf16.msra.mxu0 %v841
    %856 = vmatmul.bf16.gmra.mxu0 %v846
    %v857 = vpop.f32.mrf.mxu0
    %v858 = vadd.f32 %v832, %v857
    %v859 = vpop.f32.mrf.mxu0
    %v860 = vadd.f32 %v832, %v859
    %861 = vdwg.mxu0
    %s862 = scalar_lea.vmem [#allocation2], 112
    %v863 = vld [vmem:[%s862] sm:$0xf]
    %v864 = vld [vmem:[%s862 + $0x4] sm:$0xf]
    %v865 = vld [vmem:[%s862 + $0x8] sm:$0xf]
    %v866 = vld [vmem:[%s862 + $0xc] sm:$0xf]
    %v867 = vpack.c.bf16 %v766, %v765
    %v868 = vld [vmem:[%s4 + $0xd] sm:$0x1]
    %v869 = vperm.slane %v868, 0
    %v874 = vunpack.c.l.b16 %v863
    %v875 = vunpack.c.l.b16 %v864
    %v876 = vunpack.c.l.b16 %v865
    %v877 = vunpack.c.l.b16 %v866
    %v878 = vpack.c.b16 %v875, %v874
    %v879 = vpack.c.b16 %v877, %v876
    %v883 = vsel %vm222, %v867, 0
    %885 = vmatpush.bf16.msra.mxu0 0
    %886 = vmatpush.bf16.msra.mxu0 0
    %887 = vmatpush.bf16.msra.mxu0 0
    %888 = vmatpush.bf16.msra.mxu0 0
    %889 = vmatpush.bf16.msra.mxu0 0
    %890 = vmatpush.bf16.msra.mxu0 0
    %891 = vmatpush.bf16.msra.mxu0 %v879
    %892 = vmatpush.bf16.msra.mxu0 %v878
    %893 = vmatmul.bf16.gmra.mxu0 %v883
    %v894 = vpop.f32.mrf.mxu0
    %v895 = vadd.f32 %v869, %v894
    %v896 = vpop.f32.mrf.mxu0
    %v897 = vadd.f32 %v869, %v896
    %898 = vdwg.mxu0
    %s899 = scalar_lea.vmem [#allocation2], 128
    %v900 = vld [vmem:[%s899] sm:$0xf]
    %v901 = vld [vmem:[%s899 + $0x4] sm:$0xf]
    %v902 = vld [vmem:[%s899 + $0x8] sm:$0xf]
    %v903 = vld [vmem:[%s899 + $0xc] sm:$0xf]
    %v904 = vld [vmem:[%s4 + $0xe] sm:$0x1]
    %v905 = vperm.slane %v904, 0
    %v910 = vunpack.c.l.b16 %v900
    %v911 = vunpack.c.l.b16 %v901
    %v912 = vunpack.c.l.b16 %v902
    %v913 = vunpack.c.l.b16 %v903
    %v914 = vpack.c.b16 %v911, %v910
    %v915 = vpack.c.b16 %v913, %v912
    %918 = vmatpush.bf16.msra.mxu0 0
    %919 = vmatpush.bf16.msra.mxu0 0
    %920 = vmatpush.bf16.msra.mxu0 0
    %921 = vmatpush.bf16.msra.mxu0 0
    %922 = vmatpush.bf16.msra.mxu0 0
    %923 = vmatpush.bf16.msra.mxu0 0
    %924 = vmatpush.bf16.msra.mxu0 %v915
    %925 = vmatpush.bf16.msra.mxu0 %v914
    %926 = vmatmul.bf16.gmra.mxu0 %v883
    %v927 = vpop.f32.mrf.mxu0
    %v928 = vadd.f32 %v905, %v927
    %v929 = vpop.f32.mrf.mxu0
    %v930 = vadd.f32 %v905, %v929
    %931 = vdwg.mxu0
    %v932 = vpack.c.bf16 %v897, %v895
    %v933 = vpack.c.bf16 %v930, %v928
    %v934 = vmul.f32 %v858, %v395
    %v935 = vmul.f32 %v860, %v395
    %v936 = vpack.c.bf16 %v935, %v934
    %v938 = vsel %vm222, %v936, 0
    %v941 = vsel %vm222, %v932, 0
    %943 = vmatpush.bf16.xpose.msra.mxu0 0
    %944 = vmatpush.bf16.xpose.msra.mxu0 0
    %945 = vmatpush.bf16.xpose.msra.mxu0 0
    %946 = vmatpush.bf16.xpose.msra.mxu0 0
    %947 = vmatpush.bf16.xpose.msra.mxu0 0
    %948 = vmatpush.bf16.xpose.msra.mxu0 0
    %949 = vmatpush.bf16.xpose.msra.mxu0 0
    %950 = vmatpush.bf16.xpose.msra.mxu0 %v941
    %951 = vmatmul.bf16.gmra.mxu0 %v938
    %v952 = vpop.f32.mrf.mxu0
    %v953 = vadd.f32 0.0, %v952
    %v954 = vpop.f32.mrf.mxu0
    %v955 = vadd.f32 0.0, %v954
    %956 = vdwg.mxu0
    %v957 = vmul.f32 %v953, 0.25
    %v958 = vmul.f32 %v955, 0.25
    %v959 = vadd.f32 %v957, %v218
    %v960 = vadd.f32 %v958, %v219
    %v961 = vsel %vm423, %v959, -inf
    %962 = vmax.xlane.f32.xlu0 %v961
    %v963 = vpop.xlane.xlu0 %962
    %v964 = vsel %vm423, %v960, -inf
    %965 = vmax.xlane.f32.xlu0 %v964
    %v966 = vpop.xlane.xlu0 %965
    %v967 = vsub.f32 %v959, %v963
    %v968 = vsub.f32 %v960, %v966
    %v969 = vmul.f32 %v967, 1.442695
    %v970 = vpow.pop %v969
    %v971 = vmul.f32 %v968, 1.442695
    %v972 = vpow.pop %v971
    %v973 = vsel %vm423, %v970, 0.0
    %974 = vadd.xlane.f32.xlu0 %v973
    %v975 = vpop.xlane.xlu0 %974
    %v976 = vsel %vm423, %v972, 0.0
    %977 = vadd.xlane.f32.xlu0 %v976
    %v978 = vpop.xlane.xlu0 %977
    %v979 = vrcp.pop %v975
    %v980 = vmul.f32 %v975, %v979
    %v981 = vsub.f32 1.0, %v980
    %v982 = vmul.f32 %v979, %v981
    %v983 = vadd.f32 %v979, %v982
    %vm984 = vweird.f32 %v975
    %vm985 = vweird.f32 %v979
    %vm986 = vmor %vm984, %vm985
    %v987 = vsel %vm986, %v979, %v983
    %v988 = vand.u32 2147483647, %v975
    %vm989 = vcmp.eq.f32.partialorder %v988, 8.507059e+37
    %v990 = vand.u32 %v975, 2147483648
    %v991 = vor.u32 1.1754944e-38, %v990
    %v992 = vsel %vm989, %v991, %v987
    %v993 = vrcp.pop %v978
    %v994 = vmul.f32 %v978, %v993
    %v995 = vsub.f32 1.0, %v994
    %v996 = vmul.f32 %v993, %v995
    %v997 = vadd.f32 %v993, %v996
    %vm998 = vweird.f32 %v978
    %vm999 = vweird.f32 %v993
    %vm1000 = vmor %vm998, %vm999
    %v1001 = vsel %vm1000, %v993, %v997
    %v1002 = vand.u32 2147483647, %v978
    %vm1003 = vcmp.eq.f32.partialorder %v1002, 8.507059e+37
    %v1004 = vand.u32 %v978, 2147483648
    %v1005 = vor.u32 1.1754944e-38, %v1004
    %v1006 = vsel %vm1003, %v1005, %v1001
    %v1007 = vmul.f32 %v970, %v992
    %v1008 = vmul.f32 %v972, %v1006
    %v1009 = vpack.c.bf16 %v1008, %v1007
    %v1011 = vsel %vm423, %v1009, 0
    %1013 = vmatpush.bf16.msra.mxu0 0
    %1014 = vmatpush.bf16.msra.mxu0 0
    %1015 = vmatpush.bf16.msra.mxu0 0
    %1016 = vmatpush.bf16.msra.mxu0 0
    %1017 = vmatpush.bf16.msra.mxu0 0
    %1018 = vmatpush.bf16.msra.mxu0 0
    %1019 = vmatpush.bf16.msra.mxu0 0
    %1020 = vmatpush.bf16.msra.mxu0 %v933
    %1021 = vmatmul.bf16.gmra.mxu0 %v1011
    %v1022 = vpop.f32.mrf.mxu0
    %v1023 = vadd.f32 0.0, %v1022
    %v1024 = vpop.f32.mrf.mxu0
    %v1025 = vadd.f32 0.0, %v1024
    %1026 = vdwg.mxu0
    %v1027 = vmul.f32 %v1023, %v395
    %v1028 = vmul.f32 %v1025, %v395
    %v1029 = vadd.f32 %v1027, 0.0
    %v1030 = vadd.f32 %v1028, 0.0
    %v1031 = vmul.f32 %v858, %v495
    %v1032 = vmul.f32 %v860, %v495
    %v1033 = vpack.c.bf16 %v1032, %v1031
    %v1035 = vsel %vm222, %v1033, 0
    %1037 = vmatpush.bf16.xpose.msra.mxu0 0
    %1038 = vmatpush.bf16.xpose.msra.mxu0 0
    %1039 = vmatpush.bf16.xpose.msra.mxu0 0
    %1040 = vmatpush.bf16.xpose.msra.mxu0 0
    %1041 = vmatpush.bf16.xpose.msra.mxu0 0
    %1042 = vmatpush.bf16.xpose.msra.mxu0 0
    %1043 = vmatpush.bf16.xpose.msra.mxu0 0
    %1044 = vmatpush.bf16.xpose.msra.mxu0 %v941
    %1045 = vmatmul.bf16.gmra.mxu0 %v1035
    %v1046 = vpop.f32.mrf.mxu0
    %v1047 = vadd.f32 0.0, %v1046
    %v1048 = vpop.f32.mrf.mxu0
    %v1049 = vadd.f32 0.0, %v1048
    %1050 = vdwg.mxu0
    %v1051 = vmul.f32 %v1047, 0.25
    %v1052 = vmul.f32 %v1049, 0.25
    %v1053 = vadd.f32 %v1051, %v218
    %v1054 = vadd.f32 %v1052, %v219
    %v1055 = vsel %vm423, %v1053, -inf
    %1056 = vmax.xlane.f32.xlu0 %v1055
    %v1057 = vpop.xlane.xlu0 %1056
    %v1058 = vsel %vm423, %v1054, -inf
    %1059 = vmax.xlane.f32.xlu0 %v1058
    %v1060 = vpop.xlane.xlu0 %1059
    %v1061 = vsub.f32 %v1053, %v1057
    %v1062 = vsub.f32 %v1054, %v1060
    %v1063 = vmul.f32 %v1061, 1.442695
    %v1064 = vpow.pop %v1063
    %v1065 = vmul.f32 %v1062, 1.442695
    %v1066 = vpow.pop %v1065
    %v1067 = vsel %vm423, %v1064, 0.0
    %1068 = vadd.xlane.f32.xlu0 %v1067
    %v1069 = vpop.xlane.xlu0 %1068
    %v1070 = vsel %vm423, %v1066, 0.0
    %1071 = vadd.xlane.f32.xlu0 %v1070
    %v1072 = vpop.xlane.xlu0 %1071
    %v1073 = vrcp.pop %v1069
    %v1074 = vmul.f32 %v1069, %v1073
    %v1075 = vsub.f32 1.0, %v1074
    %v1076 = vmul.f32 %v1073, %v1075
    %v1077 = vadd.f32 %v1073, %v1076
    %vm1078 = vweird.f32 %v1069
    %vm1079 = vweird.f32 %v1073
    %vm1080 = vmor %vm1078, %vm1079
    %v1081 = vsel %vm1080, %v1073, %v1077
    %v1082 = vand.u32 2147483647, %v1069
    %vm1083 = vcmp.eq.f32.partialorder %v1082, 8.507059e+37
    %v1084 = vand.u32 %v1069, 2147483648
    %v1085 = vor.u32 1.1754944e-38, %v1084
    %v1086 = vsel %vm1083, %v1085, %v1081
    %v1087 = vrcp.pop %v1072
    %v1088 = vmul.f32 %v1072, %v1087
    %v1089 = vsub.f32 1.0, %v1088
    %v1090 = vmul.f32 %v1087, %v1089
    %v1091 = vadd.f32 %v1087, %v1090
    %vm1092 = vweird.f32 %v1072
    %vm1093 = vweird.f32 %v1087
    %vm1094 = vmor %vm1092, %vm1093
    %v1095 = vsel %vm1094, %v1087, %v1091
    %v1096 = vand.u32 2147483647, %v1072
    %vm1097 = vcmp.eq.f32.partialorder %v1096, 8.507059e+37
    %v1098 = vand.u32 %v1072, 2147483648
    %v1099 = vor.u32 1.1754944e-38, %v1098
    %v1100 = vsel %vm1097, %v1099, %v1095
    %v1101 = vmul.f32 %v1064, %v1086
    %v1102 = vmul.f32 %v1066, %v1100
    %v1103 = vpack.c.bf16 %v1102, %v1101
    %v1105 = vsel %vm423, %v1103, 0
    %1107 = vmatpush.bf16.msra.mxu0 0
    %1108 = vmatpush.bf16.msra.mxu0 0
    %1109 = vmatpush.bf16.msra.mxu0 0
    %1110 = vmatpush.bf16.msra.mxu0 0
    %1111 = vmatpush.bf16.msra.mxu0 0
    %1112 = vmatpush.bf16.msra.mxu0 0
    %1113 = vmatpush.bf16.msra.mxu0 0
    %1114 = vmatpush.bf16.msra.mxu0 %v933
    %1115 = vmatmul.bf16.gmra.mxu0 %v1105
    %v1116 = vpop.f32.mrf.mxu0
    %v1117 = vadd.f32 0.0, %v1116
    %v1118 = vpop.f32.mrf.mxu0
    %v1119 = vadd.f32 0.0, %v1118
    %1120 = vdwg.mxu0
    %v1121 = vmul.f32 %v1117, %v495
    %v1122 = vmul.f32 %v1119, %v495
    %v1123 = vadd.f32 %v1029, %v1121
    %v1124 = vadd.f32 %v1030, %v1122
    %s1125 = scalar_lea.vmem [#allocation2], 144
    %v1126 = vld [vmem:[%s1125] sm:$0xf]
    %v1127 = vld [vmem:[%s1125 + $0x4] sm:$0xf]
    %v1128 = vld [vmem:[%s1125 + $0x8] sm:$0xf]
    %v1129 = vld [vmem:[%s1125 + $0xc] sm:$0xf]
    %v1130 = vpack.c.bf16 %v1124, %v1123
    %v1131 = vld [vmem:[%s4 + $0xf] sm:$0x1]
    %v1132 = vperm.slane %v1131, 0
    %v1137 = vunpack.c.l.b16 %v1126
    %v1138 = vunpack.c.l.b16 %v1127
    %v1139 = vunpack.c.l.b16 %v1128
    %v1140 = vunpack.c.l.b16 %v1129
    %v1141 = vpack.c.b16 %v1138, %v1137
    %v1142 = vpack.c.b16 %v1140, %v1139
    %v1146 = vsel %vm222, %v1130, 0
    %1148 = vmatpush.bf16.msra.mxu0 0
    %1149 = vmatpush.bf16.msra.mxu0 0
    %1150 = vmatpush.bf16.msra.mxu0 0
    %1151 = vmatpush.bf16.msra.mxu0 0
    %1152 = vmatpush.bf16.msra.mxu0 0
    %1153 = vmatpush.bf16.msra.mxu0 0
    %1154 = vmatpush.bf16.msra.mxu0 %v1142
    %1155 = vmatpush.bf16.msra.mxu0 %v1141
    %1156 = vmatmul.bf16.gmra.mxu0 %v1146
    %v1157 = vpop.f32.mrf.mxu0
    %v1158 = vadd.f32 %v1132, %v1157
    %v1159 = vpop.f32.mrf.mxu0
    %v1160 = vadd.f32 %v1132, %v1159
    %1161 = vdwg.mxu0
    %v1162 = vadd.f32 %v823, %v1158
    %v1163 = vadd.f32 %v824, %v1160
    %v1164 = vld [vmem:[%s4 + $0x10] sm:$0x1]
    %v1165 = vld [vmem:[%s4 + $0x11] sm:$0x1]
    %v1166 = vsel %vm222, %v1162, 0.0
    %1167 = vadd.xlane.f32.xlu0 %v1166
    %v1168 = vpop.xlane.xlu0 %1167
    %v1169 = vsel %vm222, %v1163, 0.0
    %1170 = vadd.xlane.f32.xlu0 %v1169
    %v1171 = vpop.xlane.xlu0 %1170
    %v1172 = vmul.f32 %v1168, %v235
    %v1173 = vmul.f32 %v1171, %v235
    %v1174 = vmul.f32 %v1162, %v1162
    %v1175 = vmul.f32 %v1163, %v1163
    %v1176 = vsel %vm222, %v1174, 0.0
    %1177 = vadd.xlane.f32.xlu0 %v1176
    %v1178 = vpop.xlane.xlu0 %1177
    %v1179 = vsel %vm222, %v1175, 0.0
    %1180 = vadd.xlane.f32.xlu0 %v1179
    %v1181 = vpop.xlane.xlu0 %1180
    %v1182 = vmul.f32 %v1178, %v235
    %v1183 = vmul.f32 %v1181, %v235
    %v1184 = vmul.f32 %v1172, %v1172
    %v1185 = vmul.f32 %v1173, %v1173
    %v1186 = vsub.f32 %v1182, %v1184
    %v1187 = vsub.f32 %v1183, %v1185
    %v1188 = vmax.f32 %v1186, 0.0
    %v1189 = vmax.f32 %v1187, 0.0
    %v1190 = vsub.f32 %v1162, %v1172
    %v1191 = vsub.f32 %v1163, %v1173
    %v1192 = vadd.f32 %v1188, 1e-08
    %v1193 = vadd.f32 %v1189, 1e-08
    %v1194 = vrsqrt.pop %v1192
    %v1195 = vmul.f32 %v1194, %v1192
    %v1196 = vmul.f32 %v1195, %v1194
    %v1197 = vmul.f32 0.5, %v1196
    %v1198 = vsub.f32 1.5, %v1197
    %v1199 = vmul.f32 %v1194, %v1198
    %vm1200 = vweird.f32 %v1192
    %vm1201 = vweird.f32 %v1194
    %vm1202 = vmor %vm1200, %vm1201
    %v1203 = vsel %vm1202, %v1194, %v1199
    %v1204 = vrsqrt.pop %v1193
    %v1205 = vmul.f32 %v1204, %v1193
    %v1206 = vmul.f32 %v1205, %v1204
    %v1207 = vmul.f32 0.5, %v1206
    %v1208 = vsub.f32 1.5, %v1207
    %v1209 = vmul.f32 %v1204, %v1208
    %vm1210 = vweird.f32 %v1193
    %vm1211 = vweird.f32 %v1204
    %vm1212 = vmor %vm1210, %vm1211
    %v1213 = vsel %vm1212, %v1204, %v1209
    %v1214 = vmul.f32 %v1190, %v1203
    %v1215 = vmul.f32 %v1191, %v1213
    %v1216 = vperm.slane %v1164, 0
    %v1217 = vmul.f32 %v1214, %v1216
    %v1218 = vmul.f32 %v1215, %v1216
    %v1219 = vperm.slane %v1165, 0
    %v1220 = vadd.f32 %v1217, %v1219
    %v1221 = vadd.f32 %v1218, %v1219
    %s1222 = scalar_lea.vmem [#allocation2], 160
    %v1223 = vld [vmem:[%s1222] sm:$0xf]
    %v1224 = vld [vmem:[%s1222 + $0x4] sm:$0xf]
    %v1225 = vld [vmem:[%s1222 + $0x8] sm:$0xf]
    %v1226 = vld [vmem:[%s1222 + $0xc] sm:$0xf]
    %v1227 = vpack.c.bf16 %v1221, %v1220
    %v1228 = vld [vmem:[%s4 + $0x12] sm:$0x1]
    %v1229 = vperm.slane %v1228, 0
    %v1234 = vunpack.c.l.b16 %v1223
    %v1235 = vunpack.c.l.b16 %v1224
    %v1236 = vunpack.c.l.b16 %v1225
    %v1237 = vunpack.c.l.b16 %v1226
    %v1238 = vpack.c.b16 %v1235, %v1234
    %v1239 = vpack.c.b16 %v1237, %v1236
    %v1243 = vsel %vm222, %v1227, 0
    %1245 = vmatpush.bf16.msra.mxu0 0
    %1246 = vmatpush.bf16.msra.mxu0 0
    %1247 = vmatpush.bf16.msra.mxu0 0
    %1248 = vmatpush.bf16.msra.mxu0 0
    %1249 = vmatpush.bf16.msra.mxu0 0
    %1250 = vmatpush.bf16.msra.mxu0 0
    %1251 = vmatpush.bf16.msra.mxu0 %v1239
    %1252 = vmatpush.bf16.msra.mxu0 %v1238
    %1253 = vmatmul.bf16.gmra.mxu0 %v1243
    %v1254 = vpop.f32.mrf.mxu0
    %v1255 = vadd.f32 %v1229, %v1254
    %v1256 = vpop.f32.mrf.mxu0
    %v1257 = vadd.f32 %v1229, %v1256
    %1258 = vdwg.mxu0
    %v1259 = vmax.f32 %v1255, 0.0
    %v1260 = vmax.f32 %v1257, 0.0
    %s1261 = scalar_lea.vmem [#allocation2], 176
    %v1262 = vld [vmem:[%s1261] sm:$0xf]
    %v1263 = vld [vmem:[%s1261 + $0x4] sm:$0xf]
    %v1264 = vld [vmem:[%s1261 + $0x8] sm:$0xf]
    %v1265 = vld [vmem:[%s1261 + $0xc] sm:$0xf]
    %v1266 = vpack.c.bf16 %v1260, %v1259
    %v1267 = vld [vmem:[%s4 + $0x13] sm:$0x1]
    %v1268 = vperm.slane %v1267, 0
    %v1273 = vunpack.c.l.b16 %v1262
    %v1274 = vunpack.c.l.b16 %v1263
    %v1275 = vunpack.c.l.b16 %v1264
    %v1276 = vunpack.c.l.b16 %v1265
    %v1277 = vpack.c.b16 %v1274, %v1273
    %v1278 = vpack.c.b16 %v1276, %v1275
    %v1282 = vsel %vm222, %v1266, 0
    %1284 = vmatpush.bf16.msra.mxu0 0
    %1285 = vmatpush.bf16.msra.mxu0 0
    %1286 = vmatpush.bf16.msra.mxu0 0
    %1287 = vmatpush.bf16.msra.mxu0 0
    %1288 = vmatpush.bf16.msra.mxu0 0
    %1289 = vmatpush.bf16.msra.mxu0 0
    %1290 = vmatpush.bf16.msra.mxu0 %v1278
    %1291 = vmatpush.bf16.msra.mxu0 %v1277
    %1292 = vmatmul.bf16.gmra.mxu0 %v1282
    %v1293 = vpop.f32.mrf.mxu0
    %v1294 = vadd.f32 %v1268, %v1293
    %v1295 = vpop.f32.mrf.mxu0
    %v1296 = vadd.f32 %v1268, %v1295
    %1297 = vdwg.mxu0
    %v1298 = vadd.f32 %v1220, %v1294
    %v1299 = vadd.f32 %v1221, %v1296
    %v1300 = vmul.f32 %v1298, %v209
    %v1301 = vmul.f32 %v1299, %v214
    %v1302 = vld [vmem:[%s4 + $0x14] sm:$0x1]
    %v1303 = vld [vmem:[%s4 + $0x15] sm:$0x1]
    %v1304 = vsel %vm222, %v1300, 0.0
    %1305 = vadd.xlane.f32.xlu0 %v1304
    %v1306 = vpop.xlane.xlu0 %1305
    %v1307 = vsel %vm222, %v1301, 0.0
    %1308 = vadd.xlane.f32.xlu0 %v1307
    %v1309 = vpop.xlane.xlu0 %1308
    %v1310 = vmul.f32 %v1306, %v235
    %v1311 = vmul.f32 %v1309, %v235
    %v1312 = vmul.f32 %v1300, %v1300
    %v1313 = vmul.f32 %v1301, %v1301
    %v1314 = vsel %vm222, %v1312, 0.0
    %1315 = vadd.xlane.f32.xlu0 %v1314
    %v1316 = vpop.xlane.xlu0 %1315
    %v1317 = vsel %vm222, %v1313, 0.0
    %1318 = vadd.xlane.f32.xlu0 %v1317
    %v1319 = vpop.xlane.xlu0 %1318
    %v1320 = vmul.f32 %v1316, %v235
    %v1321 = vmul.f32 %v1319, %v235
    %v1322 = vmul.f32 %v1310, %v1310
    %v1323 = vmul.f32 %v1311, %v1311
    %v1324 = vsub.f32 %v1320, %v1322
    %v1325 = vsub.f32 %v1321, %v1323
    %v1326 = vmax.f32 %v1324, 0.0
    %v1327 = vmax.f32 %v1325, 0.0
    %v1328 = vsub.f32 %v1300, %v1310
    %v1329 = vsub.f32 %v1301, %v1311
    %v1330 = vadd.f32 %v1326, 1e-08
    %v1331 = vadd.f32 %v1327, 1e-08
    %v1332 = vrsqrt.pop %v1330
    %v1333 = vmul.f32 %v1332, %v1330
    %v1334 = vmul.f32 %v1333, %v1332
    %v1335 = vmul.f32 0.5, %v1334
    %v1336 = vsub.f32 1.5, %v1335
    %v1337 = vmul.f32 %v1332, %v1336
    %vm1338 = vweird.f32 %v1330
    %vm1339 = vweird.f32 %v1332
    %vm1340 = vmor %vm1338, %vm1339
    %v1341 = vsel %vm1340, %v1332, %v1337
    %v1342 = vrsqrt.pop %v1331
    %v1343 = vmul.f32 %v1342, %v1331
    %v1344 = vmul.f32 %v1343, %v1342
    %v1345 = vmul.f32 0.5, %v1344
    %v1346 = vsub.f32 1.5, %v1345
    %v1347 = vmul.f32 %v1342, %v1346
    %vm1348 = vweird.f32 %v1331
    %vm1349 = vweird.f32 %v1342
    %vm1350 = vmor %vm1348, %vm1349
    %v1351 = vsel %vm1350, %v1342, %v1347
    %v1352 = vmul.f32 %v1328, %v1341
    %v1353 = vmul.f32 %v1329, %v1351
    %v1354 = vperm.slane %v1302, 0
    %v1355 = vmul.f32 %v1352, %v1354
    %v1356 = vmul.f32 %v1353, %v1354
    %v1357 = vperm.slane %v1303, 0
    %v1358 = vadd.f32 %v1355, %v1357
    %v1359 = vadd.f32 %v1356, %v1357
    %s1360 = scalar_lea.vmem [#allocation2], 192
    %v1361 = vld [vmem:[%s1360] sm:$0xf]
    %v1362 = vld [vmem:[%s1360 + $0x4] sm:$0xf]
    %v1363 = vld [vmem:[%s1360 + $0x8] sm:$0xf]
    %v1364 = vld [vmem:[%s1360 + $0xc] sm:$0xf]
    %v1365 = vpack.c.bf16 %v1359, %v1358
    %v1366 = vld [vmem:[%s4 + $0x16] sm:$0x1]
    %v1367 = vperm.slane %v1366, 0
    %v1372 = vunpack.c.l.b16 %v1361
    %v1373 = vunpack.c.l.b16 %v1362
    %v1374 = vunpack.c.l.b16 %v1363
    %v1375 = vunpack.c.l.b16 %v1364
    %v1376 = vpack.c.b16 %v1373, %v1372
    %v1377 = vpack.c.b16 %v1375, %v1374
    %v1381 = vsel %vm222, %v1365, 0
    %1383 = vmatpush.bf16.msra.mxu0 0
    %1384 = vmatpush.bf16.msra.mxu0 0
    %1385 = vmatpush.bf16.msra.mxu0 0
    %1386 = vmatpush.bf16.msra.mxu0 0
    %1387 = vmatpush.bf16.msra.mxu0 0
    %1388 = vmatpush.bf16.msra.mxu0 0
    %1389 = vmatpush.bf16.msra.mxu0 %v1377
    %1390 = vmatpush.bf16.msra.mxu0 %v1376
    %1391 = vmatmul.bf16.gmra.mxu0 %v1381
    %v1392 = vpop.f32.mrf.mxu0
    %v1393 = vadd.f32 %v1367, %v1392
    %v1394 = vpop.f32.mrf.mxu0
    %v1395 = vadd.f32 %v1367, %v1394
    %1396 = vdwg.mxu0
    %v1397 = vadd.f32 %v1393, %v192
    %v1398 = vadd.f32 %v1395, %v194
    %v1399 = vmul.f32 %v1397, %v182
    %v1400 = vmul.f32 %v1398, %v184
    %v1401 = vsel %vm222, %v1399, 0.0
    %1402 = vadd.xlane.f32.xlu0 %v1401
    %v1403 = vpop.xlane.xlu0 %1402
    %v1404 = vsel %vm222, %v1400, 0.0
    %1405 = vadd.xlane.f32.xlu0 %v1404
    %v1406 = vpop.xlane.xlu0 %1405
    %v1407 = vmul.f32 %v1397, %v187
    %v1408 = vmul.f32 %v1398, %v189
    %v1409 = vsel %vm222, %v1407, 0.0
    %1410 = vadd.xlane.f32.xlu0 %v1409
    %v1411 = vpop.xlane.xlu0 %1410
    %v1412 = vsel %vm222, %v1408, 0.0
    %1413 = vadd.xlane.f32.xlu0 %v1412
    %v1414 = vpop.xlane.xlu0 %1413
    %vm1415 = vcmask 7168
    %v1416 = vsel %vm1415, %v1403, %v1411
    %v1417 = vsel %vm1415, %v1406, %v1414
    %vm1418 = vcmask 15360
    %1419 = vst.msk [vmem:[%s5] sm:$0xff] %vm1418, %v1416
    %1420 = vst.msk [vmem:[%s5 + $0x8] sm:$0xff] %vm1418, %v1417
    // Predicated region
    $region26: #{sasrec_forward.1} parent=1 // pred_check
      _
    $region27: #{sasrec_forward.1} parent=1 // pred_check_branch
      %1422 = sbr.rel (0) target = $region29
    $region28: #{sasrec_forward.1} parent=1 // pred_region
      _
    $region29: #{sasrec_forward.1} parent=1 // pred_fallthru
      _
    // Predicated region
    $region30: #{sasrec_forward.1} parent=1 // pred_check
      _
    $region31: #{sasrec_forward.1} parent=1 // pred_check_branch
      %1424 = sbr.rel (0) target = $region33
    $region32: #{sasrec_forward.1} parent=1 // pred_region
      _
    $region33: #{sasrec_forward.1} parent=1 // pred_fallthru
      _
    %1425 = vsyncpa [#allocation3], 1

</llo_original>
